<compile_context>
chip_gen: v7x
topology: tpu7x:2x2x1
jax: 0.10.0
libtpu: 0.0.40
codegen_flags: <defaults>
</compile_context>

<pallas_src>
import numpy as np
import jax
import jax.numpy as jnp
from jax import lax
from jax.experimental import pallas as pl
from jax.experimental.pallas import tpu as pltpu

_HIGHEST = lax.Precision.HIGHEST   # only used by the pure-JAX reference


def _mxdot(a, b):
    """bf16 MXU matmul with f32 accumulation."""
    return jnp.dot(a.astype(jnp.bfloat16), b.astype(jnp.bfloat16),
                   preferred_element_type=jnp.float32)


# ---------------------------------------------------------------------------
# Fused forward kernel (one grid step == one batch element)
# ---------------------------------------------------------------------------
def _make_fused_kernel(cfg):
    n_params = cfg["n_params"]
    blocks = cfg["blocks"]

    def conv_im2col(x, w, K, pad, stride, pad_scr):
        """1-D conv over time as a single im2col matmul.

        x: [T, Cin] f32 value, w: [K*Cin, Cout] bf16 value.
        Returns (pre-activation [Tout, Cout] f32, centre [Tout, Cin]) where
        `centre` == x[stride*t, :] (valid because pad == K // 2); it is the
        residual-path input and comes for free from the im2col matrix.
        """
        T, C = x.shape
        # Zero-padded copy of the input in VMEM scratch (no HBM traffic).
        pad_scr[...] = jnp.zeros(pad_scr.shape, jnp.float32)
        pad_scr[pad:pad + T, :] = x
        xp = pad_scr[...]
        t_full = T + 2 * pad - K + 1                       # stride-1 output length
        # im2col: K contiguous time-shifted slices concatenated along lanes.
        cols = jnp.concatenate([xp[k:k + t_full, :] for k in range(K)], axis=1)
        if stride > 1:
            # Pick rows stride*t with a tiny 0/1 selection matmul.
            t_out = (T + 2 * pad - K) // stride + 1
            ri = lax.broadcasted_iota(jnp.int32, (t_out, t_full), 0)
            ci = lax.broadcasted_iota(jnp.int32, (t_out, t_full), 1)
            sel = (ci == stride * ri).astype(jnp.float32)
            cols = _mxdot(sel, cols)
        centre = cols[:, (K // 2) * C:(K // 2 + 1) * C]
        return _mxdot(cols, w), centre

    def kernel(x_ref, *refs):
        param_refs = refs[:n_params]
        o_ref = refs[n_params]
        scratch_refs = refs[n_params + 1:]
        prm = iter(param_refs)
        scr = iter(scratch_refs)

        x = x_ref[0]                                        # [T0, bins] (channels = freq bins)

        # First conv: kernel 3, pad 1, stride 1, no BN / bias / ReLU.
        w0 = next(prm)[...]
        a, _ = conv_im2col(x, w0, K=3, pad=1, stride=1, pad_scr=next(scr))

        # Residual blocks.
        for blk in blocks:
            w1 = next(prm)[...]; b1 = next(prm)[...]
            w2 = next(prm)[...]; b2 = next(prm)[...]
            if blk["proj"]:
                wr = next(prm)[...]; br = next(prm)[...]
            h, centre = conv_im2col(a, w1, K=9, pad=4, stride=blk["stride"],
                                    pad_scr=next(scr))
            h = jnp.maximum(h + b1, 0.0)                    # conv1 + bn1 + relu
            if blk["proj"]:
                res = jnp.maximum(_mxdot(centre, wr) + br, 0.0)   # 1x1 conv + bn + relu
            else:
                res = centre                                # identity residual
            y, _ = conv_im2col(h, w2, K=9, pad=4, stride=1, pad_scr=next(scr))
            a = jnp.maximum(y + b2 + res, 0.0)              # conv2 + bn2 + residual + relu

        # Global average pool over time + linear (1/T folded into fc weight).
        wfc = next(prm)[...]; bfc = next(prm)[...]
        z = _mxdot(a, wfc)                                  # [T_last, n_class]
        o_ref[0] = jnp.sum(z, axis=0, keepdims=True) + bfc  # [1, n_class]

    return kernel


# ---------------------------------------------------------------------------
# Host-side parameter prep: BN fold, im2col weight layout, 1/T fold into fc.
# ---------------------------------------------------------------------------
def _prep(params, T0):
    flat = []
    w0 = params["conv0_w"]                                  # [3, bins, C0]
    K0, bins, c0 = w0.shape
    flat.append(w0.reshape(K0 * bins, c0).astype(jnp.bfloat16))

    blocks = []
    t = T0 + 2 * 1 - 3 + 1                                  # length after first conv
    for blk in params["blocks"]:
        cin, cout = blk["in"], blk["out"]
        proj = cin != cout
        stride = 2 if proj else 1
        s1, h1 = blk["bn1"]
        s2, h2 = blk["bn2"]
        flat.append((blk["w1"] * s1[None, None, :]).reshape(9 * cin, cout).astype(jnp.bfloat16))
        flat.append(h1.reshape(1, cout).astype(jnp.float32))
        flat.append((blk["w2"] * s2[None, None, :]).reshape(9 * cout, cout).astype(jnp.bfloat16))
        flat.append(h2.reshape(1, cout).astype(jnp.float32))
        if proj:
            sr, hr = blk["bnr"]
            flat.append((blk["wr"][0] * sr[None, :]).astype(jnp.bfloat16))   # [cin, cout]
            flat.append(hr.reshape(1, cout).astype(jnp.float32))
        t_out = (t + 2 * 4 - 9) // stride + 1
        blocks.append({"proj": proj, "stride": stride, "cin": cin, "cout": cout,
                       "tin": t, "tout": t_out})
        t = t_out

    n_class = params["fc_w"].shape[1]
    flat.append((params["fc_w"] * (1.0 / t)).astype(jnp.bfloat16))
    flat.append(params["fc_b"].reshape(1, n_class).astype(jnp.float32))

    cfg = {"n_params": len(flat), "blocks": blocks, "t_last": t,
           "bins": bins, "n_class": n_class, "t0": T0}
    return flat, cfg


def tcresnet_forward(x_nchw, params):
    B, _, bins, T0 = x_nchw.shape
    # Module rearrange 'b c f t -> b f c t' with c==1  ==>  1-D conv over time
    # with the freq bins as channels.  Kernel layout: [B, time, freq].
    x_btf = jnp.transpose(x_nchw[:, 0], (0, 2, 1))          # [B, T, bins]

    flat, cfg = _prep(params, T0)
    n_class = cfg["n_class"]

    in_specs = [pl.BlockSpec((1, T0, bins), lambda b: (b, 0, 0))]
    for arr in flat:
        in_specs.append(pl.BlockSpec(arr.shape, lambda b: (0, 0)))

    # One padded-input VMEM scratch per conv (pad done in-kernel).
    scratch_shapes = [pltpu.VMEM((T0 + 2, bins), jnp.float32)]          # first conv, pad 1
    for bc in cfg["blocks"]:
        scratch_shapes.append(pltpu.VMEM((bc["tin"] + 8, bc["cin"]), jnp.float32))   # conv1
        scratch_shapes.append(pltpu.VMEM((bc["tout"] + 8, bc["cout"]), jnp.float32)) # conv2

    out = pl.pallas_call(
        _make_fused_kernel(cfg),
        grid=(B,),
        in_specs=in_specs,
        out_specs=pl.BlockSpec((1, 1, n_class), lambda b: (b, 0, 0)),
        out_shape=jax.ShapeDtypeStruct((B, 1, n_class), jnp.float32),
        scratch_shapes=scratch_shapes,
        compiler_params=pltpu.CompilerParams(
            dimension_semantics=("parallel",)),
    )(x_btf, *flat)
    return out.reshape(B, n_class)


# ---------------------------------------------------------------------------
# Parameters (deterministic synthetic init)
# ---------------------------------------------------------------------------
def init_params(key, bins, n_channels, n_class):
    keys = iter(jax.random.split(key, 64))

    def conv_w(cout, cin, k):
        fan = cin * k
        return jax.random.normal(next(keys), (k, cin, cout), jnp.float32) / jnp.sqrt(fan)

    def bn(c):  # eval-mode BN folded to (scale, shift)
        gamma = 1.0 + 0.1 * jax.random.normal(next(keys), (c,), jnp.float32)
        beta = 0.1 * jax.random.normal(next(keys), (c,), jnp.float32)
        mean = 0.1 * jax.random.normal(next(keys), (c,), jnp.float32)
        var = 1.0 + 0.1 * jax.random.uniform(next(keys), (c,), jnp.float32)
        scale = gamma / jnp.sqrt(var + 1e-5)
        shift = beta - mean * scale
        return scale, shift

    params = {"conv0_w": conv_w(n_channels[0], bins, 3), "blocks": []}
    for cin, cout in zip(n_channels[:-1], n_channels[1:]):
        blk = {"in": cin, "out": cout,
               "w1": conv_w(cout, cin, 9), "bn1": bn(cout),
               "w2": conv_w(cout, cout, 9), "bn2": bn(cout)}
        if cin != cout:
            blk["wr"] = conv_w(cout, cin, 1)
            blk["bnr"] = bn(cout)
        params["blocks"].append(blk)
    params["fc_w"] = 0.1 * jax.random.normal(next(keys), (n_channels[-1], n_class), jnp.float32)
    params["fc_b"] = 0.1 * jax.random.normal(next(keys), (n_class,), jnp.float32)
    return params


# ---------------------------------------------------------------------------
# Pure-JAX reference (full f32 precision) for the correctness check
# ---------------------------------------------------------------------------
def _ref_conv1d(x, w, stride, pad):
    return lax.conv_general_dilated(
        x, w, window_strides=(stride,), padding=[(pad, pad)],
        dimension_numbers=("NWC", "WIO", "NWC"), precision=_HIGHEST)


def tcresnet_reference(x_nchw, params):
    x = jnp.transpose(x_nchw[:, 0], (0, 2, 1))               # [B, time, freq]
    x = _ref_conv1d(x, params["conv0_w"], 1, 1)
    for blk in params["blocks"]:
        if blk["in"] != blk["out"]:
            s = 2
            res = _ref_conv1d(x, blk["wr"], s, 0)
            res = jnp.maximum(res * blk["bnr"][0] + blk["bnr"][1], 0.0)
        else:
            s = 1
            res = x
        h = _ref_conv1d(x, blk["w1"], s, 4)
        h = jnp.maximum(h * blk["bn1"][0] + blk["bn1"][1], 0.0)
        h = _ref_conv1d(h, blk["w2"], 1, 4)
        h = h * blk["bn2"][0] + blk["bn2"][1]
        x = jnp.maximum(h + res, 0.0)
    m = jnp.mean(x, axis=1)
    return m @ params["fc_w"] + params["fc_b"]


if __name__ == "__main__":
    bins = 16                      # frequency bins (== conv input channels)
    n_channels = [16, 24, 24, 32]  # includes one identity-residual block (24->24)
    n_class = 10
    B, T = 2, 16                   # batch, time steps

    root = jax.random.PRNGKey(0)
    pkey, xkey = jax.random.split(root)
    params = init_params(pkey, bins, n_channels, n_class)
    x = jax.random.normal(xkey, (B, 1, bins, T), jnp.float32)  # [B, 1, freq, time]

    out = jax.block_until_ready(tcresnet_forward(x, params))
    assert out.shape == (B, n_class), out.shape

    ref = jax.block_until_ready(tcresnet_reference(x, params))
    # Kernel matmuls use bf16 operands with f32 accumulation (per perf review);
    # the reference is full-f32 HIGHEST, hence the looser tolerance.
    np.testing.assert_allclose(np.asarray(out), np.asarray(ref), rtol=5e-2, atol=5e-2)
    print("KERNEL_OK")
</pallas_src>

<mosaic_0001>
module attributes {stable_mosaic.version = 11 : i64} {
  func.func @kernel(%arg0: i32, %arg1: memref<1x16x16xf32, #tpu.memory_space<vmem>>, %arg2: memref<48x16xbf16, #tpu.memory_space<vmem>>, %arg3: memref<144x24xbf16, #tpu.memory_space<vmem>>, %arg4: memref<1x24xf32, #tpu.memory_space<vmem>>, %arg5: memref<216x24xbf16, #tpu.memory_space<vmem>>, %arg6: memref<1x24xf32, #tpu.memory_space<vmem>>, %arg7: memref<16x24xbf16, #tpu.memory_space<vmem>>, %arg8: memref<1x24xf32, #tpu.memory_space<vmem>>, %arg9: memref<216x24xbf16, #tpu.memory_space<vmem>>, %arg10: memref<1x24xf32, #tpu.memory_space<vmem>>, %arg11: memref<216x24xbf16, #tpu.memory_space<vmem>>, %arg12: memref<1x24xf32, #tpu.memory_space<vmem>>, %arg13: memref<216x32xbf16, #tpu.memory_space<vmem>>, %arg14: memref<1x32xf32, #tpu.memory_space<vmem>>, %arg15: memref<288x32xbf16, #tpu.memory_space<vmem>>, %arg16: memref<1x32xf32, #tpu.memory_space<vmem>>, %arg17: memref<24x32xbf16, #tpu.memory_space<vmem>>, %arg18: memref<1x32xf32, #tpu.memory_space<vmem>>, %arg19: memref<32x10xbf16, #tpu.memory_space<vmem>>, %arg20: memref<1x10xf32, #tpu.memory_space<vmem>>, %arg21: memref<1x1x10xf32, #tpu.memory_space<vmem>>, %arg22: memref<18x16xf32, #tpu.memory_space<vmem>>, %arg23: memref<24x16xf32, #tpu.memory_space<vmem>>, %arg24: memref<16x24xf32, #tpu.memory_space<vmem>>, %arg25: memref<16x24xf32, #tpu.memory_space<vmem>>, %arg26: memref<16x24xf32, #tpu.memory_space<vmem>>, %arg27: memref<16x24xf32, #tpu.memory_space<vmem>>, %arg28: memref<12x32xf32, #tpu.memory_space<vmem>>) attributes {dimension_semantics = [#tpu.dimension_semantics<parallel>], iteration_bounds = array<i64: 2>, scalar_prefetch = 0 : i64, scratch_operands = 7 : i64, tpu.core_type = #tpu.core_type<tc>, window_params = [{transform_indices = @transform_0, window_bounds = array<i64: 1, 16, 16>}, {pipeline_mode = #tpu.pipeline_mode<synchronous>, transform_indices = @transform_1, window_bounds = array<i64: 48, 16>}, {pipeline_mode = #tpu.pipeline_mode<synchronous>, transform_indices = @transform_2, window_bounds = array<i64: 144, 24>}, {pipeline_mode = #tpu.pipeline_mode<synchronous>, transform_indices = @transform_3, window_bounds = array<i64: 1, 24>}, {pipeline_mode = #tpu.pipeline_mode<synchronous>, transform_indices = @transform_4, window_bounds = array<i64: 216, 24>}, {pipeline_mode = #tpu.pipeline_mode<synchronous>, transform_indices = @transform_5, window_bounds = array<i64: 1, 24>}, {pipeline_mode = #tpu.pipeline_mode<synchronous>, transform_indices = @transform_6, window_bounds = array<i64: 16, 24>}, {pipeline_mode = #tpu.pipeline_mode<synchronous>, transform_indices = @transform_7, window_bounds = array<i64: 1, 24>}, {pipeline_mode = #tpu.pipeline_mode<synchronous>, transform_indices = @transform_8, window_bounds = array<i64: 216, 24>}, {pipeline_mode = #tpu.pipeline_mode<synchronous>, transform_indices = @transform_9, window_bounds = array<i64: 1, 24>}, {pipeline_mode = #tpu.pipeline_mode<synchronous>, transform_indices = @transform_10, window_bounds = array<i64: 216, 24>}, {pipeline_mode = #tpu.pipeline_mode<synchronous>, transform_indices = @transform_11, window_bounds = array<i64: 1, 24>}, {pipeline_mode = #tpu.pipeline_mode<synchronous>, transform_indices = @transform_12, window_bounds = array<i64: 216, 32>}, {pipeline_mode = #tpu.pipeline_mode<synchronous>, transform_indices = @transform_13, window_bounds = array<i64: 1, 32>}, {pipeline_mode = #tpu.pipeline_mode<synchronous>, transform_indices = @transform_14, window_bounds = array<i64: 288, 32>}, {pipeline_mode = #tpu.pipeline_mode<synchronous>, transform_indices = @transform_15, window_bounds = array<i64: 1, 32>}, {pipeline_mode = #tpu.pipeline_mode<synchronous>, transform_indices = @transform_16, window_bounds = array<i64: 24, 32>}, {pipeline_mode = #tpu.pipeline_mode<synchronous>, transform_indices = @transform_17, window_bounds = array<i64: 1, 32>}, {pipeline_mode = #tpu.pipeline_mode<synchronous>, transform_indices = @transform_18, window_bounds = array<i64: 32, 10>}, {pipeline_mode = #tpu.pipeline_mode<synchronous>, transform_indices = @transform_19, window_bounds = array<i64: 1, 10>}, {transform_indices = @transform_20, window_bounds = array<i64: 1, 1, 10>}]} {
    %c0 = arith.constant 0 : index
    %c0_0 = arith.constant 0 : index
    %c0_1 = arith.constant 0 : index
    %0 = vector.load %arg1[%c0, %c0_0, %c0_1] : memref<1x16x16xf32, #tpu.memory_space<vmem>>, vector<1x16x16xf32>
    %1 = vector.shape_cast %0 : vector<1x16x16xf32> to vector<16x16xf32>
    %c0_2 = arith.constant 0 : index
    %c0_3 = arith.constant 0 : index
    %2 = vector.load %arg2[%c0_2, %c0_3] : memref<48x16xbf16, #tpu.memory_space<vmem>>, vector<48x16xbf16>
    %cst = arith.constant 0.000000e+00 : f32
    %3 = vector.broadcast %cst : f32 to vector<18x16xf32>
    %c0_4 = arith.constant 0 : index
    %c0_5 = arith.constant 0 : index
    %4 = vector.load %arg22[%c0_4, %c0_5] : memref<18x16xf32, #tpu.memory_space<vmem>>, vector<18x16xf32>
    tpu.vector_store %arg22[%c0_4, %c0_5], %3 {strides = array<i32>} : memref<18x16xf32, #tpu.memory_space<vmem>>, vector<18x16xf32>,
    %c1 = arith.constant 1 : index
    %c0_6 = arith.constant 0 : index
    %5 = vector.load %arg22[%c1, %c0_6] : memref<18x16xf32, #tpu.memory_space<vmem>>, vector<16x16xf32>
    tpu.vector_store %arg22[%c1, %c0_6], %1 {strides = array<i32>} : memref<18x16xf32, #tpu.memory_space<vmem>>, vector<16x16xf32>,
    %c0_7 = arith.constant 0 : index
    %c0_8 = arith.constant 0 : index
    %6 = vector.load %arg22[%c0_7, %c0_8] : memref<18x16xf32, #tpu.memory_space<vmem>>, vector<18x16xf32>
    %7 = vector.extract_strided_slice %6 {offsets = [0, 0], sizes = [16, 16], strides = [1, 1]} : vector<18x16xf32> to vector<16x16xf32>
    %8 = vector.extract_strided_slice %6 {offsets = [1, 0], sizes = [16, 16], strides = [1, 1]} : vector<18x16xf32> to vector<16x16xf32>
    %9 = vector.extract_strided_slice %6 {offsets = [2, 0], sizes = [16, 16], strides = [1, 1]} : vector<18x16xf32> to vector<16x16xf32>
    %10 = tpu.concatenate %7, %8, %9 in 1 : vector<16x16xf32>, vector<16x16xf32>, vector<16x16xf32> -> vector<16x48xf32>
    %11 = arith.truncf %10 : vector<16x48xf32> to vector<16x48xbf16>
    %cst_9 = arith.constant dense<0.000000e+00> : vector<16x16xf32>
    %12 = tpu.matmul %11, %2, %cst_9 {dimension_numbers = #tpu.dot_dimension_numbers<[1], [0], [0], [1], [0, 0, 1, 1], [], []>} : vector<16x48xbf16>, vector<48x16xbf16>, vector<16x16xf32> -> vector<16x16xf32>
    %c0_10 = arith.constant 0 : index
    %c0_11 = arith.constant 0 : index
    %13 = vector.load %arg3[%c0_10, %c0_11] : memref<144x24xbf16, #tpu.memory_space<vmem>>, vector<144x24xbf16>
    %c0_12 = arith.constant 0 : index
    %c0_13 = arith.constant 0 : index
    %14 = vector.load %arg4[%c0_12, %c0_13] : memref<1x24xf32, #tpu.memory_space<vmem>>, vector<1x24xf32>
    %c0_14 = arith.constant 0 : index
    %c0_15 = arith.constant 0 : index
    %15 = vector.load %arg5[%c0_14, %c0_15] : memref<216x24xbf16, #tpu.memory_space<vmem>>, vector<216x24xbf16>
    %c0_16 = arith.constant 0 : index
    %c0_17 = arith.constant 0 : index
    %16 = vector.load %arg6[%c0_16, %c0_17] : memref<1x24xf32, #tpu.memory_space<vmem>>, vector<1x24xf32>
    %c0_18 = arith.constant 0 : index
    %c0_19 = arith.constant 0 : index
    %17 = vector.load %arg7[%c0_18, %c0_19] : memref<16x24xbf16, #tpu.memory_space<vmem>>, vector<16x24xbf16>
    %c0_20 = arith.constant 0 : index
    %c0_21 = arith.constant 0 : index
    %18 = vector.load %arg8[%c0_20, %c0_21] : memref<1x24xf32, #tpu.memory_space<vmem>>, vector<1x24xf32>
    %cst_22 = arith.constant 0.000000e+00 : f32
    %19 = vector.broadcast %cst_22 : f32 to vector<24x16xf32>
    %c0_23 = arith.constant 0 : index
    %c0_24 = arith.constant 0 : index
    %20 = vector.load %arg23[%c0_23, %c0_24] : memref<24x16xf32, #tpu.memory_space<vmem>>, vector<24x16xf32>
    tpu.vector_store %arg23[%c0_23, %c0_24], %19 {strides = array<i32>} : memref<24x16xf32, #tpu.memory_space<vmem>>, vector<24x16xf32>,
    %c4 = arith.constant 4 : index
    %c0_25 = arith.constant 0 : index
    %21 = vector.load %arg23[%c4, %c0_25] : memref<24x16xf32, #tpu.memory_space<vmem>>, vector<16x16xf32>
    tpu.vector_store %arg23[%c4, %c0_25], %12 {strides = array<i32>} : memref<24x16xf32, #tpu.memory_space<vmem>>, vector<16x16xf32>,
    %c0_26 = arith.constant 0 : index
    %c0_27 = arith.constant 0 : index
    %22 = vector.load %arg23[%c0_26, %c0_27] : memref<24x16xf32, #tpu.memory_space<vmem>>, vector<24x16xf32>
    %23 = vector.extract_strided_slice %22 {offsets = [0, 0], sizes = [16, 16], strides = [1, 1]} : vector<24x16xf32> to vector<16x16xf32>
    %24 = vector.extract_strided_slice %22 {offsets = [1, 0], sizes = [16, 16], strides = [1, 1]} : vector<24x16xf32> to vector<16x16xf32>
    %25 = vector.extract_strided_slice %22 {offsets = [2, 0], sizes = [16, 16], strides = [1, 1]} : vector<24x16xf32> to vector<16x16xf32>
    %26 = vector.extract_strided_slice %22 {offsets = [3, 0], sizes = [16, 16], strides = [1, 1]} : vector<24x16xf32> to vector<16x16xf32>
    %27 = vector.extract_strided_slice %22 {offsets = [4, 0], sizes = [16, 16], strides = [1, 1]} : vector<24x16xf32> to vector<16x16xf32>
    %28 = vector.extract_strided_slice %22 {offsets = [5, 0], sizes = [16, 16], strides = [1, 1]} : vector<24x16xf32> to vector<16x16xf32>
    %29 = vector.extract_strided_slice %22 {offsets = [6, 0], sizes = [16, 16], strides = [1, 1]} : vector<24x16xf32> to vector<16x16xf32>
    %30 = vector.extract_strided_slice %22 {offsets = [7, 0], sizes = [16, 16], strides = [1, 1]} : vector<24x16xf32> to vector<16x16xf32>
    %31 = vector.extract_strided_slice %22 {offsets = [8, 0], sizes = [16, 16], strides = [1, 1]} : vector<24x16xf32> to vector<16x16xf32>
    %32 = tpu.concatenate %23, %24, %25, %26, %27, %28, %29, %30, %31 in 1 : vector<16x16xf32>, vector<16x16xf32>, vector<16x16xf32>, vector<16x16xf32>, vector<16x16xf32>, vector<16x16xf32>, vector<16x16xf32>, vector<16x16xf32>, vector<16x16xf32> -> vector<16x144xf32>
    %33 = tpu.iota {dimensions = array<i32: 0>} : vector<8x16xi32>
    %34 = tpu.iota {dimensions = array<i32: 1>} : vector<8x16xi32>
    %c2_i32 = arith.constant 2 : i32
    %35 = vector.broadcast %c2_i32 : i32 to vector<8x16xi32>
    %36 = arith.muli %35, %33 : vector<8x16xi32>
    %37 = arith.cmpi eq, %34, %36 : vector<8x16xi32>
    %38 = arith.extui %37 : vector<8x16xi1> to vector<8x16xi32>
    %39 = arith.sitofp %38 : vector<8x16xi32> to vector<8x16xf32>
    %40 = arith.truncf %39 : vector<8x16xf32> to vector<8x16xbf16>
    %41 = arith.truncf %32 : vector<16x144xf32> to vector<16x144xbf16>
    %cst_28 = arith.constant dense<0.000000e+00> : vector<8x144xf32>
    %42 = tpu.matmul %40, %41, %cst_28 {dimension_numbers = #tpu.dot_dimension_numbers<[1], [0], [0], [1], [0, 0, 1, 1], [], []>} : vector<8x16xbf16>, vector<16x144xbf16>, vector<8x144xf32> -> vector<8x144xf32>
    %43 = vector.extract_strided_slice %42 {offsets = [0, 64], sizes = [8, 16], strides = [1, 1]} : vector<8x144xf32> to vector<8x16xf32>
    %44 = arith.truncf %42 : vector<8x144xf32> to vector<8x144xbf16>
    %cst_29 = arith.constant dense<0.000000e+00> : vector<8x24xf32>
    %45 = tpu.matmul %44, %13, %cst_29 {dimension_numbers = #tpu.dot_dimension_numbers<[1], [0], [0], [1], [0, 0, 1, 1], [], []>} : vector<8x144xbf16>, vector<144x24xbf16>, vector<8x24xf32> -> vector<8x24xf32>
    %46 = vector.broadcast %14 : vector<1x24xf32> to vector<8x24xf32>
    %47 = arith.addf %45, %46 : vector<8x24xf32>
    %cst_30 = arith.constant 0.000000e+00 : f32
    %48 = vector.broadcast %cst_30 : f32 to vector<8x24xf32>
    %49 = arith.maximumf %47, %48 : vector<8x24xf32>
    %50 = arith.truncf %43 : vector<8x16xf32> to vector<8x16xbf16>
    %cst_31 = arith.constant dense<0.000000e+00> : vector<8x24xf32>
    %51 = tpu.matmul %50, %17, %cst_31 {dimension_numbers = #tpu.dot_dimension_numbers<[1], [0], [0], [1], [0, 0, 1, 1], [], []>} : vector<8x16xbf16>, vector<16x24xbf16>, vector<8x24xf32> -> vector<8x24xf32>
    %52 = vector.broadcast %18 : vector<1x24xf32> to vector<8x24xf32>
    %53 = arith.addf %51, %52 : vector<8x24xf32>
    %cst_32 = arith.constant 0.000000e+00 : f32
    %54 = vector.broadcast %cst_32 : f32 to vector<8x24xf32>
    %55 = arith.maximumf %53, %54 : vector<8x24xf32>
    %cst_33 = arith.constant 0.000000e+00 : f32
    %56 = vector.broadcast %cst_33 : f32 to vector<16x24xf32>
    %c0_34 = arith.constant 0 : index
    %c0_35 = arith.constant 0 : index
    %57 = vector.load %arg24[%c0_34, %c0_35] : memref<16x24xf32, #tpu.memory_space<vmem>>, vector<16x24xf32>
    tpu.vector_store %arg24[%c0_34, %c0_35], %56 {strides = array<i32>} : memref<16x24xf32, #tpu.memory_space<vmem>>, vector<16x24xf32>,
    %c4_36 = arith.constant 4 : index
    %c0_37 = arith.constant 0 : index
    %58 = vector.load %arg24[%c4_36, %c0_37] : memref<16x24xf32, #tpu.memory_space<vmem>>, vector<8x24xf32>
    tpu.vector_store %arg24[%c4_36, %c0_37], %49 {strides = array<i32>} : memref<16x24xf32, #tpu.memory_space<vmem>>, vector<8x24xf32>,
    %c0_38 = arith.constant 0 : index
    %c0_39 = arith.constant 0 : index
    %59 = vector.load %arg24[%c0_38, %c0_39] : memref<16x24xf32, #tpu.memory_space<vmem>>, vector<16x24xf32>
    %60 = vector.extract_strided_slice %59 {offsets = [0, 0], sizes = [8, 24], strides = [1, 1]} : vector<16x24xf32> to vector<8x24xf32>
    %61 = vector.extract_strided_slice %59 {offsets = [1, 0], sizes = [8, 24], strides = [1, 1]} : vector<16x24xf32> to vector<8x24xf32>
    %62 = vector.extract_strided_slice %59 {offsets = [2, 0], sizes = [8, 24], strides = [1, 1]} : vector<16x24xf32> to vector<8x24xf32>
    %63 = vector.extract_strided_slice %59 {offsets = [3, 0], sizes = [8, 24], strides = [1, 1]} : vector<16x24xf32> to vector<8x24xf32>
    %64 = vector.extract_strided_slice %59 {offsets = [4, 0], sizes = [8, 24], strides = [1, 1]} : vector<16x24xf32> to vector<8x24xf32>
    %65 = vector.extract_strided_slice %59 {offsets = [5, 0], sizes = [8, 24], strides = [1, 1]} : vector<16x24xf32> to vector<8x24xf32>
    %66 = vector.extract_strided_slice %59 {offsets = [6, 0], sizes = [8, 24], strides = [1, 1]} : vector<16x24xf32> to vector<8x24xf32>
    %67 = vector.extract_strided_slice %59 {offsets = [7, 0], sizes = [8, 24], strides = [1, 1]} : vector<16x24xf32> to vector<8x24xf32>
    %68 = vector.extract_strided_slice %59 {offsets = [8, 0], sizes = [8, 24], strides = [1, 1]} : vector<16x24xf32> to vector<8x24xf32>
    %69 = tpu.concatenate %60, %61, %62, %63, %64, %65, %66, %67, %68 in 1 : vector<8x24xf32>, vector<8x24xf32>, vector<8x24xf32>, vector<8x24xf32>, vector<8x24xf32>, vector<8x24xf32>, vector<8x24xf32>, vector<8x24xf32>, vector<8x24xf32> -> vector<8x216xf32>
    %70 = arith.truncf %69 : vector<8x216xf32> to vector<8x216xbf16>
    %cst_40 = arith.constant dense<0.000000e+00> : vector<8x24xf32>
    %71 = tpu.matmul %70, %15, %cst_40 {dimension_numbers = #tpu.dot_dimension_numbers<[1], [0], [0], [1], [0, 0, 1, 1], [], []>} : vector<8x216xbf16>, vector<216x24xbf16>, vector<8x24xf32> -> vector<8x24xf32>
    %72 = vector.broadcast %16 : vector<1x24xf32> to vector<8x24xf32>
    %73 = arith.addf %71, %72 : vector<8x24xf32>
    %74 = arith.addf %73, %55 : vector<8x24xf32>
    %cst_41 = arith.constant 0.000000e+00 : f32
    %75 = vector.broadcast %cst_41 : f32 to vector<8x24xf32>
    %76 = arith.maximumf %74, %75 : vector<8x24xf32>
    %c0_42 = arith.constant 0 : index
    %c0_43 = arith.constant 0 : index
    %77 = vector.load %arg9[%c0_42, %c0_43] : memref<216x24xbf16, #tpu.memory_space<vmem>>, vector<216x24xbf16>
    %c0_44 = arith.constant 0 : index
    %c0_45 = arith.constant 0 : index
    %78 = vector.load %arg10[%c0_44, %c0_45] : memref<1x24xf32, #tpu.memory_space<vmem>>, vector<1x24xf32>
    %c0_46 = arith.constant 0 : index
    %c0_47 = arith.constant 0 : index
    %79 = vector.load %arg11[%c0_46, %c0_47] : memref<216x24xbf16, #tpu.memory_space<vmem>>, vector<216x24xbf16>
    %c0_48 = arith.constant 0 : index
    %c0_49 = arith.constant 0 : index
    %80 = vector.load %arg12[%c0_48, %c0_49] : memref<1x24xf32, #tpu.memory_space<vmem>>, vector<1x24xf32>
    %cst_50 = arith.constant 0.000000e+00 : f32
    %81 = vector.broadcast %cst_50 : f32 to vector<16x24xf32>
    %c0_51 = arith.constant 0 : index
    %c0_52 = arith.constant 0 : index
    %82 = vector.load %arg25[%c0_51, %c0_52] : memref<16x24xf32, #tpu.memory_space<vmem>>, vector<16x24xf32>
    tpu.vector_store %arg25[%c0_51, %c0_52], %81 {strides = array<i32>} : memref<16x24xf32, #tpu.memory_space<vmem>>, vector<16x24xf32>,
    %c4_53 = arith.constant 4 : index
    %c0_54 = arith.constant 0 : index
    %83 = vector.load %arg25[%c4_53, %c0_54] : memref<16x24xf32, #tpu.memory_space<vmem>>, vector<8x24xf32>
    tpu.vector_store %arg25[%c4_53, %c0_54], %76 {strides = array<i32>} : memref<16x24xf32, #tpu.memory_space<vmem>>, vector<8x24xf32>,
    %c0_55 = arith.constant 0 : index
    %c0_56 = arith.constant 0 : index
    %84 = vector.load %arg25[%c0_55, %c0_56] : memref<16x24xf32, #tpu.memory_space<vmem>>, vector<16x24xf32>
    %85 = vector.extract_strided_slice %84 {offsets = [0, 0], sizes = [8, 24], strides = [1, 1]} : vector<16x24xf32> to vector<8x24xf32>
    %86 = vector.extract_strided_slice %84 {offsets = [1, 0], sizes = [8, 24], strides = [1, 1]} : vector<16x24xf32> to vector<8x24xf32>
    %87 = vector.extract_strided_slice %84 {offsets = [2, 0], sizes = [8, 24], strides = [1, 1]} : vector<16x24xf32> to vector<8x24xf32>
    %88 = vector.extract_strided_slice %84 {offsets = [3, 0], sizes = [8, 24], strides = [1, 1]} : vector<16x24xf32> to vector<8x24xf32>
    %89 = vector.extract_strided_slice %84 {offsets = [4, 0], sizes = [8, 24], strides = [1, 1]} : vector<16x24xf32> to vector<8x24xf32>
    %90 = vector.extract_strided_slice %84 {offsets = [5, 0], sizes = [8, 24], strides = [1, 1]} : vector<16x24xf32> to vector<8x24xf32>
    %91 = vector.extract_strided_slice %84 {offsets = [6, 0], sizes = [8, 24], strides = [1, 1]} : vector<16x24xf32> to vector<8x24xf32>
    %92 = vector.extract_strided_slice %84 {offsets = [7, 0], sizes = [8, 24], strides = [1, 1]} : vector<16x24xf32> to vector<8x24xf32>
    %93 = vector.extract_strided_slice %84 {offsets = [8, 0], sizes = [8, 24], strides = [1, 1]} : vector<16x24xf32> to vector<8x24xf32>
    %94 = tpu.concatenate %85, %86, %87, %88, %89, %90, %91, %92, %93 in 1 : vector<8x24xf32>, vector<8x24xf32>, vector<8x24xf32>, vector<8x24xf32>, vector<8x24xf32>, vector<8x24xf32>, vector<8x24xf32>, vector<8x24xf32>, vector<8x24xf32> -> vector<8x216xf32>
    %95 = vector.extract_strided_slice %94 {offsets = [0, 96], sizes = [8, 24], strides = [1, 1]} : vector<8x216xf32> to vector<8x24xf32>
    %96 = arith.truncf %94 : vector<8x216xf32> to vector<8x216xbf16>
    %cst_57 = arith.constant dense<0.000000e+00> : vector<8x24xf32>
    %97 = tpu.matmul %96, %77, %cst_57 {dimension_numbers = #tpu.dot_dimension_numbers<[1], [0], [0], [1], [0, 0, 1, 1], [], []>} : vector<8x216xbf16>, vector<216x24xbf16>, vector<8x24xf32> -> vector<8x24xf32>
    %98 = vector.broadcast %78 : vector<1x24xf32> to vector<8x24xf32>
    %99 = arith.addf %97, %98 : vector<8x24xf32>
    %cst_58 = arith.constant 0.000000e+00 : f32
    %100 = vector.broadcast %cst_58 : f32 to vector<8x24xf32>
    %101 = arith.maximumf %99, %100 : vector<8x24xf32>
    %cst_59 = arith.constant 0.000000e+00 : f32
    %102 = vector.broadcast %cst_59 : f32 to vector<16x24xf32>
    %c0_60 = arith.constant 0 : index
    %c0_61 = arith.constant 0 : index
    %103 = vector.load %arg26[%c0_60, %c0_61] : memref<16x24xf32, #tpu.memory_space<vmem>>, vector<16x24xf32>
    tpu.vector_store %arg26[%c0_60, %c0_61], %102 {strides = array<i32>} : memref<16x24xf32, #tpu.memory_space<vmem>>, vector<16x24xf32>,
    %c4_62 = arith.constant 4 : index
    %c0_63 = arith.constant 0 : index
    %104 = vector.load %arg26[%c4_62, %c0_63] : memref<16x24xf32, #tpu.memory_space<vmem>>, vector<8x24xf32>
    tpu.vector_store %arg26[%c4_62, %c0_63], %101 {strides = array<i32>} : memref<16x24xf32, #tpu.memory_space<vmem>>, vector<8x24xf32>,
    %c0_64 = arith.constant 0 : index
    %c0_65 = arith.constant 0 : index
    %105 = vector.load %arg26[%c0_64, %c0_65] : memref<16x24xf32, #tpu.memory_space<vmem>>, vector<16x24xf32>
    %106 = vector.extract_strided_slice %105 {offsets = [0, 0], sizes = [8, 24], strides = [1, 1]} : vector<16x24xf32> to vector<8x24xf32>
    %107 = vector.extract_strided_slice %105 {offsets = [1, 0], sizes = [8, 24], strides = [1, 1]} : vector<16x24xf32> to vector<8x24xf32>
    %108 = vector.extract_strided_slice %105 {offsets = [2, 0], sizes = [8, 24], strides = [1, 1]} : vector<16x24xf32> to vector<8x24xf32>
    %109 = vector.extract_strided_slice %105 {offsets = [3, 0], sizes = [8, 24], strides = [1, 1]} : vector<16x24xf32> to vector<8x24xf32>
    %110 = vector.extract_strided_slice %105 {offsets = [4, 0], sizes = [8, 24], strides = [1, 1]} : vector<16x24xf32> to vector<8x24xf32>
    %111 = vector.extract_strided_slice %105 {offsets = [5, 0], sizes = [8, 24], strides = [1, 1]} : vector<16x24xf32> to vector<8x24xf32>
    %112 = vector.extract_strided_slice %105 {offsets = [6, 0], sizes = [8, 24], strides = [1, 1]} : vector<16x24xf32> to vector<8x24xf32>
    %113 = vector.extract_strided_slice %105 {offsets = [7, 0], sizes = [8, 24], strides = [1, 1]} : vector<16x24xf32> to vector<8x24xf32>
    %114 = vector.extract_strided_slice %105 {offsets = [8, 0], sizes = [8, 24], strides = [1, 1]} : vector<16x24xf32> to vector<8x24xf32>
    %115 = tpu.concatenate %106, %107, %108, %109, %110, %111, %112, %113, %114 in 1 : vector<8x24xf32>, vector<8x24xf32>, vector<8x24xf32>, vector<8x24xf32>, vector<8x24xf32>, vector<8x24xf32>, vector<8x24xf32>, vector<8x24xf32>, vector<8x24xf32> -> vector<8x216xf32>
    %116 = arith.truncf %115 : vector<8x216xf32> to vector<8x216xbf16>
    %cst_66 = arith.constant dense<0.000000e+00> : vector<8x24xf32>
    %117 = tpu.matmul %116, %79, %cst_66 {dimension_numbers = #tpu.dot_dimension_numbers<[1], [0], [0], [1], [0, 0, 1, 1], [], []>} : vector<8x216xbf16>, vector<216x24xbf16>, vector<8x24xf32> -> vector<8x24xf32>
    %118 = vector.broadcast %80 : vector<1x24xf32> to vector<8x24xf32>
    %119 = arith.addf %117, %118 : vector<8x24xf32>
    %120 = arith.addf %119, %95 : vector<8x24xf32>
    %cst_67 = arith.constant 0.000000e+00 : f32
    %121 = vector.broadcast %cst_67 : f32 to vector<8x24xf32>
    %122 = arith.maximumf %120, %121 : vector<8x24xf32>
    %c0_68 = arith.constant 0 : index
    %c0_69 = arith.constant 0 : index
    %123 = vector.load %arg13[%c0_68, %c0_69] : memref<216x32xbf16, #tpu.memory_space<vmem>>, vector<216x32xbf16>
    %c0_70 = arith.constant 0 : index
    %c0_71 = arith.constant 0 : index
    %124 = vector.load %arg14[%c0_70, %c0_71] : memref<1x32xf32, #tpu.memory_space<vmem>>, vector<1x32xf32>
    %c0_72 = arith.constant 0 : index
    %c0_73 = arith.constant 0 : index
    %125 = vector.load %arg15[%c0_72, %c0_73] : memref<288x32xbf16, #tpu.memory_space<vmem>>, vector<288x32xbf16>
    %c0_74 = arith.constant 0 : index
    %c0_75 = arith.constant 0 : index
    %126 = vector.load %arg16[%c0_74, %c0_75] : memref<1x32xf32, #tpu.memory_space<vmem>>, vector<1x32xf32>
    %c0_76 = arith.constant 0 : index
    %c0_77 = arith.constant 0 : index
    %127 = vector.load %arg17[%c0_76, %c0_77] : memref<24x32xbf16, #tpu.memory_space<vmem>>, vector<24x32xbf16>
    %c0_78 = arith.constant 0 : index
    %c0_79 = arith.constant 0 : index
    %128 = vector.load %arg18[%c0_78, %c0_79] : memref<1x32xf32, #tpu.memory_space<vmem>>, vector<1x32xf32>
    %cst_80 = arith.constant 0.000000e+00 : f32
    %129 = vector.broadcast %cst_80 : f32 to vector<16x24xf32>
    %c0_81 = arith.constant 0 : index
    %c0_82 = arith.constant 0 : index
    %130 = vector.load %arg27[%c0_81, %c0_82] : memref<16x24xf32, #tpu.memory_space<vmem>>, vector<16x24xf32>
    tpu.vector_store %arg27[%c0_81, %c0_82], %129 {strides = array<i32>} : memref<16x24xf32, #tpu.memory_space<vmem>>, vector<16x24xf32>,
    %c4_83 = arith.constant 4 : index
    %c0_84 = arith.constant 0 : index
    %131 = vector.load %arg27[%c4_83, %c0_84] : memref<16x24xf32, #tpu.memory_space<vmem>>, vector<8x24xf32>
    tpu.vector_store %arg27[%c4_83, %c0_84], %122 {strides = array<i32>} : memref<16x24xf32, #tpu.memory_space<vmem>>, vector<8x24xf32>,
    %c0_85 = arith.constant 0 : index
    %c0_86 = arith.constant 0 : index
    %132 = vector.load %arg27[%c0_85, %c0_86] : memref<16x24xf32, #tpu.memory_space<vmem>>, vector<16x24xf32>
    %133 = vector.extract_strided_slice %132 {offsets = [0, 0], sizes = [8, 24], strides = [1, 1]} : vector<16x24xf32> to vector<8x24xf32>
    %134 = vector.extract_strided_slice %132 {offsets = [1, 0], sizes = [8, 24], strides = [1, 1]} : vector<16x24xf32> to vector<8x24xf32>
    %135 = vector.extract_strided_slice %132 {offsets = [2, 0], sizes = [8, 24], strides = [1, 1]} : vector<16x24xf32> to vector<8x24xf32>
    %136 = vector.extract_strided_slice %132 {offsets = [3, 0], sizes = [8, 24], strides = [1, 1]} : vector<16x24xf32> to vector<8x24xf32>
    %137 = vector.extract_strided_slice %132 {offsets = [4, 0], sizes = [8, 24], strides = [1, 1]} : vector<16x24xf32> to vector<8x24xf32>
    %138 = vector.extract_strided_slice %132 {offsets = [5, 0], sizes = [8, 24], strides = [1, 1]} : vector<16x24xf32> to vector<8x24xf32>
    %139 = vector.extract_strided_slice %132 {offsets = [6, 0], sizes = [8, 24], strides = [1, 1]} : vector<16x24xf32> to vector<8x24xf32>
    %140 = vector.extract_strided_slice %132 {offsets = [7, 0], sizes = [8, 24], strides = [1, 1]} : vector<16x24xf32> to vector<8x24xf32>
    %141 = vector.extract_strided_slice %132 {offsets = [8, 0], sizes = [8, 24], strides = [1, 1]} : vector<16x24xf32> to vector<8x24xf32>
    %142 = tpu.concatenate %133, %134, %135, %136, %137, %138, %139, %140, %141 in 1 : vector<8x24xf32>, vector<8x24xf32>, vector<8x24xf32>, vector<8x24xf32>, vector<8x24xf32>, vector<8x24xf32>, vector<8x24xf32>, vector<8x24xf32>, vector<8x24xf32> -> vector<8x216xf32>
    %143 = tpu.iota {dimensions = array<i32: 0>} : vector<4x8xi32>
    %144 = tpu.iota {dimensions = array<i32: 1>} : vector<4x8xi32>
    %c2_i32_87 = arith.constant 2 : i32
    %145 = vector.broadcast %c2_i32_87 : i32 to vector<4x8xi32>
    %146 = arith.muli %145, %143 : vector<4x8xi32>
    %147 = arith.cmpi eq, %144, %146 : vector<4x8xi32>
    %148 = arith.extui %147 : vector<4x8xi1> to vector<4x8xi32>
    %149 = arith.sitofp %148 : vector<4x8xi32> to vector<4x8xf32>
    %150 = arith.truncf %149 : vector<4x8xf32> to vector<4x8xbf16>
    %151 = arith.truncf %142 : vector<8x216xf32> to vector<8x216xbf16>
    %cst_88 = arith.constant dense<0.000000e+00> : vector<4x216xf32>
    %152 = tpu.matmul %150, %151, %cst_88 {dimension_numbers = #tpu.dot_dimension_numbers<[1], [0], [0], [1], [0, 0, 1, 1], [], []>} : vector<4x8xbf16>, vector<8x216xbf16>, vector<4x216xf32> -> vector<4x216xf32>
    %153 = vector.extract_strided_slice %152 {offsets = [0, 96], sizes = [4, 24], strides = [1, 1]} : vector<4x216xf32> to vector<4x24xf32>
    %154 = arith.truncf %152 : vector<4x216xf32> to vector<4x216xbf16>
    %cst_89 = arith.constant dense<0.000000e+00> : vector<4x32xf32>
    %155 = tpu.matmul %154, %123, %cst_89 {dimension_numbers = #tpu.dot_dimension_numbers<[1], [0], [0], [1], [0, 0, 1, 1], [], []>} : vector<4x216xbf16>, vector<216x32xbf16>, vector<4x32xf32> -> vector<4x32xf32>
    %156 = vector.broadcast %124 : vector<1x32xf32> to vector<4x32xf32>
    %157 = arith.addf %155, %156 : vector<4x32xf32>
    %cst_90 = arith.constant 0.000000e+00 : f32
    %158 = vector.broadcast %cst_90 : f32 to vector<4x32xf32>
    %159 = arith.maximumf %157, %158 : vector<4x32xf32>
    %160 = arith.truncf %153 : vector<4x24xf32> to vector<4x24xbf16>
    %cst_91 = arith.constant dense<0.000000e+00> : vector<4x32xf32>
    %161 = tpu.matmul %160, %127, %cst_91 {dimension_numbers = #tpu.dot_dimension_numbers<[1], [0], [0], [1], [0, 0, 1, 1], [], []>} : vector<4x24xbf16>, vector<24x32xbf16>, vector<4x32xf32> -> vector<4x32xf32>
    %162 = vector.broadcast %128 : vector<1x32xf32> to vector<4x32xf32>
    %163 = arith.addf %161, %162 : vector<4x32xf32>
    %cst_92 = arith.constant 0.000000e+00 : f32
    %164 = vector.broadcast %cst_92 : f32 to vector<4x32xf32>
    %165 = arith.maximumf %163, %164 : vector<4x32xf32>
    %cst_93 = arith.constant 0.000000e+00 : f32
    %166 = vector.broadcast %cst_93 : f32 to vector<12x32xf32>
    %c0_94 = arith.constant 0 : index
    %c0_95 = arith.constant 0 : index
    %167 = vector.load %arg28[%c0_94, %c0_95] : memref<12x32xf32, #tpu.memory_space<vmem>>, vector<12x32xf32>
    tpu.vector_store %arg28[%c0_94, %c0_95], %166 {strides = array<i32>} : memref<12x32xf32, #tpu.memory_space<vmem>>, vector<12x32xf32>,
    %c4_96 = arith.constant 4 : index
    %c0_97 = arith.constant 0 : index
    %168 = vector.load %arg28[%c4_96, %c0_97] : memref<12x32xf32, #tpu.memory_space<vmem>>, vector<4x32xf32>
    tpu.vector_store %arg28[%c4_96, %c0_97], %159 {strides = array<i32>} : memref<12x32xf32, #tpu.memory_space<vmem>>, vector<4x32xf32>,
    %c0_98 = arith.constant 0 : index
    %c0_99 = arith.constant 0 : index
    %169 = vector.load %arg28[%c0_98, %c0_99] : memref<12x32xf32, #tpu.memory_space<vmem>>, vector<12x32xf32>
    %170 = vector.extract_strided_slice %169 {offsets = [0, 0], sizes = [4, 32], strides = [1, 1]} : vector<12x32xf32> to vector<4x32xf32>
    %171 = vector.extract_strided_slice %169 {offsets = [1, 0], sizes = [4, 32], strides = [1, 1]} : vector<12x32xf32> to vector<4x32xf32>
    %172 = vector.extract_strided_slice %169 {offsets = [2, 0], sizes = [4, 32], strides = [1, 1]} : vector<12x32xf32> to vector<4x32xf32>
    %173 = vector.extract_strided_slice %169 {offsets = [3, 0], sizes = [4, 32], strides = [1, 1]} : vector<12x32xf32> to vector<4x32xf32>
    %174 = vector.extract_strided_slice %169 {offsets = [4, 0], sizes = [4, 32], strides = [1, 1]} : vector<12x32xf32> to vector<4x32xf32>
    %175 = vector.extract_strided_slice %169 {offsets = [5, 0], sizes = [4, 32], strides = [1, 1]} : vector<12x32xf32> to vector<4x32xf32>
    %176 = vector.extract_strided_slice %169 {offsets = [6, 0], sizes = [4, 32], strides = [1, 1]} : vector<12x32xf32> to vector<4x32xf32>
    %177 = vector.extract_strided_slice %169 {offsets = [7, 0], sizes = [4, 32], strides = [1, 1]} : vector<12x32xf32> to vector<4x32xf32>
    %178 = vector.extract_strided_slice %169 {offsets = [8, 0], sizes = [4, 32], strides = [1, 1]} : vector<12x32xf32> to vector<4x32xf32>
    %179 = tpu.concatenate %170, %171, %172, %173, %174, %175, %176, %177, %178 in 1 : vector<4x32xf32>, vector<4x32xf32>, vector<4x32xf32>, vector<4x32xf32>, vector<4x32xf32>, vector<4x32xf32>, vector<4x32xf32>, vector<4x32xf32>, vector<4x32xf32> -> vector<4x288xf32>
    %180 = arith.truncf %179 : vector<4x288xf32> to vector<4x288xbf16>
    %cst_100 = arith.constant dense<0.000000e+00> : vector<4x32xf32>
    %181 = tpu.matmul %180, %125, %cst_100 {dimension_numbers = #tpu.dot_dimension_numbers<[1], [0], [0], [1], [0, 0, 1, 1], [], []>} : vector<4x288xbf16>, vector<288x32xbf16>, vector<4x32xf32> -> vector<4x32xf32>
    %182 = vector.broadcast %126 : vector<1x32xf32> to vector<4x32xf32>
    %183 = arith.addf %181, %182 : vector<4x32xf32>
    %184 = arith.addf %183, %165 : vector<4x32xf32>
    %cst_101 = arith.constant 0.000000e+00 : f32
    %185 = vector.broadcast %cst_101 : f32 to vector<4x32xf32>
    %186 = arith.maximumf %184, %185 : vector<4x32xf32>
    %c0_102 = arith.constant 0 : index
    %c0_103 = arith.constant 0 : index
    %187 = vector.load %arg19[%c0_102, %c0_103] : memref<32x10xbf16, #tpu.memory_space<vmem>>, vector<32x10xbf16>
    %c0_104 = arith.constant 0 : index
    %c0_105 = arith.constant 0 : index
    %188 = vector.load %arg20[%c0_104, %c0_105] : memref<1x10xf32, #tpu.memory_space<vmem>>, vector<1x10xf32>
    %189 = arith.truncf %186 : vector<4x32xf32> to vector<4x32xbf16>
    %cst_106 = arith.constant dense<0.000000e+00> : vector<4x10xf32>
    %190 = tpu.matmul %189, %187, %cst_106 {dimension_numbers = #tpu.dot_dimension_numbers<[1], [0], [0], [1], [0, 0, 1, 1], [], []>} : vector<4x32xbf16>, vector<32x10xbf16>, vector<4x10xf32> -> vector<4x10xf32>
    %cst_107 = arith.constant dense<0.000000e+00> : vector<10xf32>
    %191 = vector.multi_reduction <add>, %190, %cst_107 [0] : vector<4x10xf32> to vector<10xf32>
    %192 = vector.shape_cast %191 : vector<10xf32> to vector<1x10xf32>
    %193 = arith.addf %192, %188 : vector<1x10xf32>
    %c0_108 = arith.constant 0 : index
    %c0_109 = arith.constant 0 : index
    %c0_110 = arith.constant 0 : index
    %194 = vector.load %arg21[%c0_108, %c0_109, %c0_110] : memref<1x1x10xf32, #tpu.memory_space<vmem>>, vector<1x1x10xf32>
    %195 = vector.shape_cast %194 : vector<1x1x10xf32> to vector<1x10xf32>
    %196 = vector.shape_cast %193 : vector<1x10xf32> to vector<1x1x10xf32>
    tpu.vector_store %arg21[%c0_108, %c0_109, %c0_110], %196 {strides = array<i32>} : memref<1x1x10xf32, #tpu.memory_space<vmem>>, vector<1x1x10xf32>,
    return
  }
  func.func @transform_0(%arg0: i32) -> (i32, i32, i32) {
    %c0_i32 = arith.constant 0 : i32
    %c0_i32_0 = arith.constant 0 : i32
    %c0_i32_1 = arith.constant 0 : i32
    return %arg0, %c0_i32, %c0_i32_0 : i32, i32, i32
  }
  func.func @transform_1(%arg0: i32) -> (i32, i32) {
    %c0_i32 = arith.constant 0 : i32
    %c0_i32_0 = arith.constant 0 : i32
    %c0_i32_1 = arith.constant 0 : i32
    return %c0_i32, %c0_i32_0 : i32, i32
  }
  func.func @transform_2(%arg0: i32) -> (i32, i32) {
    %c0_i32 = arith.constant 0 : i32
    %c0_i32_0 = arith.constant 0 : i32
    %c0_i32_1 = arith.constant 0 : i32
    return %c0_i32, %c0_i32_0 : i32, i32
  }
  func.func @transform_3(%arg0: i32) -> (i32, i32) {
    %c0_i32 = arith.constant 0 : i32
    %c0_i32_0 = arith.constant 0 : i32
    %c0_i32_1 = arith.constant 0 : i32
    return %c0_i32, %c0_i32_0 : i32, i32
  }
  func.func @transform_4(%arg0: i32) -> (i32, i32) {
    %c0_i32 = arith.constant 0 : i32
    %c0_i32_0 = arith.constant 0 : i32
    %c0_i32_1 = arith.constant 0 : i32
    return %c0_i32, %c0_i32_0 : i32, i32
  }
  func.func @transform_5(%arg0: i32) -> (i32, i32) {
    %c0_i32 = arith.constant 0 : i32
    %c0_i32_0 = arith.constant 0 : i32
    %c0_i32_1 = arith.constant 0 : i32
    return %c0_i32, %c0_i32_0 : i32, i32
  }
  func.func @transform_6(%arg0: i32) -> (i32, i32) {
    %c0_i32 = arith.constant 0 : i32
    %c0_i32_0 = arith.constant 0 : i32
    %c0_i32_1 = arith.constant 0 : i32
    return %c0_i32, %c0_i32_0 : i32, i32
  }
  func.func @transform_7(%arg0: i32) -> (i32, i32) {
    %c0_i32 = arith.constant 0 : i32
    %c0_i32_0 = arith.constant 0 : i32
    %c0_i32_1 = arith.constant 0 : i32
    return %c0_i32, %c0_i32_0 : i32, i32
  }
  func.func @transform_8(%arg0: i32) -> (i32, i32) {
    %c0_i32 = arith.constant 0 : i32
    %c0_i32_0 = arith.constant 0 : i32
    %c0_i32_1 = arith.constant 0 : i32
    return %c0_i32, %c0_i32_0 : i32, i32
  }
  func.func @transform_9(%arg0: i32) -> (i32, i32) {
    %c0_i32 = arith.constant 0 : i32
    %c0_i32_0 = arith.constant 0 : i32
    %c0_i32_1 = arith.constant 0 : i32
    return %c0_i32, %c0_i32_0 : i32, i32
  }
  func.func @transform_10(%arg0: i32) -> (i32, i32) {
    %c0_i32 = arith.constant 0 : i32
    %c0_i32_0 = arith.constant 0 : i32
    %c0_i32_1 = arith.constant 0 : i32
    return %c0_i32, %c0_i32_0 : i32, i32
  }
  func.func @transform_11(%arg0: i32) -> (i32, i32) {
    %c0_i32 = arith.constant 0 : i32
    %c0_i32_0 = arith.constant 0 : i32
    %c0_i32_1 = arith.constant 0 : i32
    return %c0_i32, %c0_i32_0 : i32, i32
  }
  func.func @transform_12(%arg0: i32) -> (i32, i32) {
    %c0_i32 = arith.constant 0 : i32
    %c0_i32_0 = arith.constant 0 : i32
    %c0_i32_1 = arith.constant 0 : i32
    return %c0_i32, %c0_i32_0 : i32, i32
  }
  func.func @transform_13(%arg0: i32) -> (i32, i32) {
    %c0_i32 = arith.constant 0 : i32
    %c0_i32_0 = arith.constant 0 : i32
    %c0_i32_1 = arith.constant 0 : i32
    return %c0_i32, %c0_i32_0 : i32, i32
  }
  func.func @transform_14(%arg0: i32) -> (i32, i32) {
    %c0_i32 = arith.constant 0 : i32
    %c0_i32_0 = arith.constant 0 : i32
    %c0_i32_1 = arith.constant 0 : i32
    return %c0_i32, %c0_i32_0 : i32, i32
  }
  func.func @transform_15(%arg0: i32) -> (i32, i32) {
    %c0_i32 = arith.constant 0 : i32
    %c0_i32_0 = arith.constant 0 : i32
    %c0_i32_1 = arith.constant 0 : i32
    return %c0_i32, %c0_i32_0 : i32, i32
  }
  func.func @transform_16(%arg0: i32) -> (i32, i32) {
    %c0_i32 = arith.constant 0 : i32
    %c0_i32_0 = arith.constant 0 : i32
    %c0_i32_1 = arith.constant 0 : i32
    return %c0_i32, %c0_i32_0 : i32, i32
  }
  func.func @transform_17(%arg0: i32) -> (i32, i32) {
    %c0_i32 = arith.constant 0 : i32
    %c0_i32_0 = arith.constant 0 : i32
    %c0_i32_1 = arith.constant 0 : i32
    return %c0_i32, %c0_i32_0 : i32, i32
  }
  func.func @transform_18(%arg0: i32) -> (i32, i32) {
    %c0_i32 = arith.constant 0 : i32
    %c0_i32_0 = arith.constant 0 : i32
    %c0_i32_1 = arith.constant 0 : i32
    return %c0_i32, %c0_i32_0 : i32, i32
  }
  func.func @transform_19(%arg0: i32) -> (i32, i32) {
    %c0_i32 = arith.constant 0 : i32
    %c0_i32_0 = arith.constant 0 : i32
    %c0_i32_1 = arith.constant 0 : i32
    return %c0_i32, %c0_i32_0 : i32, i32
  }
  func.func @transform_20(%arg0: i32) -> (i32, i32, i32) {
    %c0_i32 = arith.constant 0 : i32
    %c0_i32_0 = arith.constant 0 : i32
    %c0_i32_1 = arith.constant 0 : i32
    return %arg0, %c0_i32, %c0_i32_0 : i32, i32, i32
  }
}

</mosaic_0001>

<llo_original>
// kernel: tpu_custom_call.1
$region0: #{tpu_custom_call.1}
  #allocation0 [shape = 'u32[]', space=smem, size = 0x4, offset = 0x4, fixed_abs, tag = 'smem constant byte address 0x4 - core index']
  #allocation1 [shape = 'u32[144,128]{1,0:T(1,128)}', space=vmem, size = 0x12000, scoped, tag = 'internal scratch']
  #allocation2 [shape = 'f32[18,16]{1,0:T(8,128)}', space=vmem, size = 0x3000, scoped, tag = 'scratch operand']
  #allocation3 [shape = 'f32[24,16]{1,0:T(8,128)}', space=vmem, size = 0x3000, scoped, tag = 'scratch operand']
  #allocation4 [shape = 'f32[16,24]{1,0:T(8,128)}', space=vmem, size = 0x2000, scoped, tag = 'scratch operand']
  #allocation5 [shape = 'f32[16,24]{1,0:T(8,128)}', space=vmem, size = 0x2000, scoped, tag = 'scratch operand']
  #allocation6 [shape = 'f32[16,24]{1,0:T(8,128)}', space=vmem, size = 0x2000, scoped, tag = 'scratch operand']
  #allocation7 [shape = 'f32[16,24]{1,0:T(8,128)}', space=vmem, size = 0x2000, scoped, tag = 'scratch operand']
  #allocation8 [shape = 'f32[12,32]{1,0:T(8,128)}', space=vmem, size = 0x2000, scoped, tag = 'scratch operand']
  %s0 = inlined_call_operand.vmem [shape: f32[2,16,16], index: 0, kind: input, shape index: {}]
  %s1 = inlined_call_operand.vmem [shape: bf16[48,16], index: 1, kind: input, shape index: {}]
  %s2 = inlined_call_operand.vmem [shape: bf16[144,24], index: 2, kind: input, shape index: {}]
  %s3 = inlined_call_operand.vmem [shape: f32[1,24], index: 3, kind: input, shape index: {}]
  %s4 = inlined_call_operand.vmem [shape: bf16[216,24], index: 4, kind: input, shape index: {}]
  %s5 = inlined_call_operand.vmem [shape: f32[1,24], index: 5, kind: input, shape index: {}]
  %s6 = inlined_call_operand.vmem [shape: bf16[16,24], index: 6, kind: input, shape index: {}]
  %s7 = inlined_call_operand.vmem [shape: f32[1,24], index: 7, kind: input, shape index: {}]
  %s8 = inlined_call_operand.vmem [shape: bf16[216,24], index: 8, kind: input, shape index: {}]
  %s9 = inlined_call_operand.vmem [shape: f32[1,24], index: 9, kind: input, shape index: {}]
  %s10 = inlined_call_operand.vmem [shape: bf16[216,24], index: 10, kind: input, shape index: {}]
  %s11 = inlined_call_operand.vmem [shape: f32[1,24], index: 11, kind: input, shape index: {}]
  %s12 = inlined_call_operand.vmem [shape: bf16[216,32], index: 12, kind: input, shape index: {}]
  %s13 = inlined_call_operand.vmem [shape: f32[1,32], index: 13, kind: input, shape index: {}]
  %s14 = inlined_call_operand.vmem [shape: bf16[288,32], index: 14, kind: input, shape index: {}]
  %s15 = inlined_call_operand.vmem [shape: f32[1,32], index: 15, kind: input, shape index: {}]
  %s16 = inlined_call_operand.vmem [shape: bf16[24,32], index: 16, kind: input, shape index: {}]
  %s17 = inlined_call_operand.vmem [shape: f32[1,32], index: 17, kind: input, shape index: {}]
  %s18 = inlined_call_operand.vmem [shape: bf16[32,10], index: 18, kind: input, shape index: {}]
  %s19 = inlined_call_operand.vmem [shape: f32[1,10], index: 19, kind: input, shape index: {}]
  %s20 = inlined_call_operand.hbm [shape: f32[2,1,10], index: 20, kind: output, shape index: {}]
  %s21 = sld [smem:[#allocation0]]
  $region113: #{tpu_custom_call.1} parent=0
    _
  %s23 = ssub.s32 1, %s21
  %s24 = scalar_select 0, %s23, %s21
  $region1: #{tpu_custom_call.1} parent=0
    #allocation9 [shape = 'u8[1024]{0}', space=vmem, size = 0x400, scoped, tag = 'output window, operand 0']
    #allocation10 [shape = 's32[2]{0}', space=sflag, size = 0x8, scoped, tag = 'scoped memory for tpu_custom_call.1']
    %25 = vsyncpa [#allocation10], 0
    %s26 = scalar_lea.sflag [#allocation10], 1
    %27 = vsyncpa %s26, 0
    loop: start=0, step=1, limit=4
    $region2: #{tpu_custom_call.1} parent=1 // loop_pre_header
      _
    $region3: #{tpu_custom_call.1} parent=1 // loop_header
      %s29 = sphi 0, %s33
      %p30 = scmp.ge.s32.totalorder %s29, 4
      %s39 = sphi 0, %s41
      %s42 = sphi 0, %s39
      %s43 = sphi 0, %s42
      %s59 = sphi 0, %s43
      %s63 = sphi 0, %s63
      %s65 = sphi 0, %s63
      %s66 = sphi 0, %s65
      %s80 = sphi 0, %s66
      %s84 = sphi 0, %s84
      %s86 = sphi 0, %s84
      %s87 = sphi 0, %s86
      %s101 = sphi 0, %s87
      %s105 = sphi 0, %s105
      %s107 = sphi 0, %s105
      %s108 = sphi 0, %s107
      %s122 = sphi 0, %s108
      %s126 = sphi 0, %s126
      %s128 = sphi 0, %s126
      %s129 = sphi 0, %s128
      %s143 = sphi 0, %s129
      %s147 = sphi 0, %s147
      %s149 = sphi 0, %s147
      %s150 = sphi 0, %s149
      %s164 = sphi 0, %s150
      %s168 = sphi 0, %s168
      %s170 = sphi 0, %s168
      %s171 = sphi 0, %s170
      %s185 = sphi 0, %s171
      %s189 = sphi 0, %s189
      %s191 = sphi 0, %s189
      %s192 = sphi 0, %s191
      %s206 = sphi 0, %s192
      %s210 = sphi 0, %s210
      %s212 = sphi 0, %s210
      %s213 = sphi 0, %s212
      %s227 = sphi 0, %s213
      %s231 = sphi 0, %s231
      %s233 = sphi 0, %s231
      %s234 = sphi 0, %s233
      %s248 = sphi 0, %s234
      %s252 = sphi 0, %s252
      %s254 = sphi 0, %s252
      %s255 = sphi 0, %s254
      %s269 = sphi 0, %s255
      %s273 = sphi 0, %s273
      %s275 = sphi 0, %s273
      %s276 = sphi 0, %s275
      %s290 = sphi 0, %s276
      %s294 = sphi 0, %s294
      %s296 = sphi 0, %s294
      %s297 = sphi 0, %s296
      %s311 = sphi 0, %s297
      %s315 = sphi 0, %s315
      %s317 = sphi 0, %s315
      %s318 = sphi 0, %s317
      %s332 = sphi 0, %s318
      %s336 = sphi 0, %s336
      %s338 = sphi 0, %s336
      %s339 = sphi 0, %s338
      %s353 = sphi 0, %s339
      %s357 = sphi 0, %s357
      %s359 = sphi 0, %s357
      %s360 = sphi 0, %s359
      %s374 = sphi 0, %s360
      %s378 = sphi 0, %s378
      %s380 = sphi 0, %s378
      %s381 = sphi 0, %s380
      %s395 = sphi 0, %s381
      %s399 = sphi 0, %s399
      %s401 = sphi 0, %s399
      %s402 = sphi 0, %s401
      %s416 = sphi 0, %s402
      %s420 = sphi 0, %s420
      %s422 = sphi 0, %s420
      %s423 = sphi 0, %s422
      %s437 = sphi 0, %s423
      %s441 = sphi 0, %s441
      %s443 = sphi 0, %s441
      %s444 = sphi 0, %s443
      %s458 = sphi 0, %s444
      %s464 = sphi 0, %s466
      %s467 = sphi 0, %s464
      %s468 = sphi 0, %s467
      %s484 = sphi 0, %s468
    $region4: #{tpu_custom_call.1} parent=1 // loop_header_branch
      %32 = sbr.rel (%p30) target = $region8
    $region5: #{tpu_custom_call.1} parent=1 // loop_body
      %s34 = ssub.s32 %s29, 1
      %s35 = ssub.s32 %s29, 2
      %s36 = sadd.s32 %s29, 1
      %s37 = ssub.s32 %s29, %s36
      %p38 = scmp.eq.s32.totalorder %s37, 0
      %s40 = sadd.s32 %s39, 1
      %s41 = scalar_select %p38, %s39, %s40
      %p44 = pneg %p38
      %p45 = scmp.eq.s32.totalorder %s29, 1
      %p46 = por %p44, %p45
      %p47 = scmp.ne.s32.totalorder %s39, %s42
      %p48 = scmp.eq.s32.totalorder %s29, 0
      %p49 = por %p47, %p48
      %p50 = scmp.ne.s32.totalorder %s39, %s42
      %p51 = scmp.eq.s32.totalorder %s34, 1
      %p52 = por %p50, %p51
      %p53 = scmp.ne.s32.totalorder %s42, %s43
      %p54 = scmp.eq.s32.totalorder %s34, 0
      %p55 = por %p53, %p54
      %p56 = scmp.ne.s32.totalorder %s42, %s43
      %p57 = scmp.eq.s32.totalorder %s35, 1
      %p58 = por %p56, %p57
      %p60 = scmp.ne.s32.totalorder %s43, %s59
      %p61 = scmp.eq.s32.totalorder %s35, 0
      %p62 = por %p60, %p61
      %s64 = sadd.s32 %s63, 1
      %p67 = scmp.eq.s32.totalorder %s29, 1
      %p68 = scmp.ne.s32.totalorder %s63, %s65
      %p69 = scmp.eq.s32.totalorder %s29, 0
      %p70 = por %p68, %p69
      %p71 = scmp.ne.s32.totalorder %s63, %s65
      %p72 = scmp.eq.s32.totalorder %s34, 1
      %p73 = por %p71, %p72
      %p74 = scmp.ne.s32.totalorder %s65, %s66
      %p75 = scmp.eq.s32.totalorder %s34, 0
      %p76 = por %p74, %p75
      %p77 = scmp.ne.s32.totalorder %s65, %s66
      %p78 = scmp.eq.s32.totalorder %s35, 1
      %p79 = por %p77, %p78
      %p81 = scmp.ne.s32.totalorder %s66, %s80
      %p82 = scmp.eq.s32.totalorder %s35, 0
      %p83 = por %p81, %p82
      %s85 = sadd.s32 %s84, 1
      %p88 = scmp.eq.s32.totalorder %s29, 1
      %p89 = scmp.ne.s32.totalorder %s84, %s86
      %p90 = scmp.eq.s32.totalorder %s29, 0
      %p91 = por %p89, %p90
      %p92 = scmp.ne.s32.totalorder %s84, %s86
      %p93 = scmp.eq.s32.totalorder %s34, 1
      %p94 = por %p92, %p93
      %p95 = scmp.ne.s32.totalorder %s86, %s87
      %p96 = scmp.eq.s32.totalorder %s34, 0
      %p97 = por %p95, %p96
      %p98 = scmp.ne.s32.totalorder %s86, %s87
      %p99 = scmp.eq.s32.totalorder %s35, 1
      %p100 = por %p98, %p99
      %p102 = scmp.ne.s32.totalorder %s87, %s101
      %p103 = scmp.eq.s32.totalorder %s35, 0
      %p104 = por %p102, %p103
      %s106 = sadd.s32 %s105, 1
      %p109 = scmp.eq.s32.totalorder %s29, 1
      %p110 = scmp.ne.s32.totalorder %s105, %s107
      %p111 = scmp.eq.s32.totalorder %s29, 0
      %p112 = por %p110, %p111
      %p113 = scmp.ne.s32.totalorder %s105, %s107
      %p114 = scmp.eq.s32.totalorder %s34, 1
      %p115 = por %p113, %p114
      %p116 = scmp.ne.s32.totalorder %s107, %s108
      %p117 = scmp.eq.s32.totalorder %s34, 0
      %p118 = por %p116, %p117
      %p119 = scmp.ne.s32.totalorder %s107, %s108
      %p120 = scmp.eq.s32.totalorder %s35, 1
      %p121 = por %p119, %p120
      %p123 = scmp.ne.s32.totalorder %s108, %s122
      %p124 = scmp.eq.s32.totalorder %s35, 0
      %p125 = por %p123, %p124
      %s127 = sadd.s32 %s126, 1
      %p130 = scmp.eq.s32.totalorder %s29, 1
      %p131 = scmp.ne.s32.totalorder %s126, %s128
      %p132 = scmp.eq.s32.totalorder %s29, 0
      %p133 = por %p131, %p132
      %p134 = scmp.ne.s32.totalorder %s126, %s128
      %p135 = scmp.eq.s32.totalorder %s34, 1
      %p136 = por %p134, %p135
      %p137 = scmp.ne.s32.totalorder %s128, %s129
      %p138 = scmp.eq.s32.totalorder %s34, 0
      %p139 = por %p137, %p138
      %p140 = scmp.ne.s32.totalorder %s128, %s129
      %p141 = scmp.eq.s32.totalorder %s35, 1
      %p142 = por %p140, %p141
      %p144 = scmp.ne.s32.totalorder %s129, %s143
      %p145 = scmp.eq.s32.totalorder %s35, 0
      %p146 = por %p144, %p145
      %s148 = sadd.s32 %s147, 1
      %p151 = scmp.eq.s32.totalorder %s29, 1
      %p152 = scmp.ne.s32.totalorder %s147, %s149
      %p153 = scmp.eq.s32.totalorder %s29, 0
      %p154 = por %p152, %p153
      %p155 = scmp.ne.s32.totalorder %s147, %s149
      %p156 = scmp.eq.s32.totalorder %s34, 1
      %p157 = por %p155, %p156
      %p158 = scmp.ne.s32.totalorder %s149, %s150
      %p159 = scmp.eq.s32.totalorder %s34, 0
      %p160 = por %p158, %p159
      %p161 = scmp.ne.s32.totalorder %s149, %s150
      %p162 = scmp.eq.s32.totalorder %s35, 1
      %p163 = por %p161, %p162
      %p165 = scmp.ne.s32.totalorder %s150, %s164
      %p166 = scmp.eq.s32.totalorder %s35, 0
      %p167 = por %p165, %p166
      %s169 = sadd.s32 %s168, 1
      %p172 = scmp.eq.s32.totalorder %s29, 1
      %p173 = scmp.ne.s32.totalorder %s168, %s170
      %p174 = scmp.eq.s32.totalorder %s29, 0
      %p175 = por %p173, %p174
      %p176 = scmp.ne.s32.totalorder %s168, %s170
      %p177 = scmp.eq.s32.totalorder %s34, 1
      %p178 = por %p176, %p177
      %p179 = scmp.ne.s32.totalorder %s170, %s171
      %p180 = scmp.eq.s32.totalorder %s34, 0
      %p181 = por %p179, %p180
      %p182 = scmp.ne.s32.totalorder %s170, %s171
      %p183 = scmp.eq.s32.totalorder %s35, 1
      %p184 = por %p182, %p183
      %p186 = scmp.ne.s32.totalorder %s171, %s185
      %p187 = scmp.eq.s32.totalorder %s35, 0
      %p188 = por %p186, %p187
      %s190 = sadd.s32 %s189, 1
      %p193 = scmp.eq.s32.totalorder %s29, 1
      %p194 = scmp.ne.s32.totalorder %s189, %s191
      %p195 = scmp.eq.s32.totalorder %s29, 0
      %p196 = por %p194, %p195
      %p197 = scmp.ne.s32.totalorder %s189, %s191
      %p198 = scmp.eq.s32.totalorder %s34, 1
      %p199 = por %p197, %p198
      %p200 = scmp.ne.s32.totalorder %s191, %s192
      %p201 = scmp.eq.s32.totalorder %s34, 0
      %p202 = por %p200, %p201
      %p203 = scmp.ne.s32.totalorder %s191, %s192
      %p204 = scmp.eq.s32.totalorder %s35, 1
      %p205 = por %p203, %p204
      %p207 = scmp.ne.s32.totalorder %s192, %s206
      %p208 = scmp.eq.s32.totalorder %s35, 0
      %p209 = por %p207, %p208
      %s211 = sadd.s32 %s210, 1
      %p214 = scmp.eq.s32.totalorder %s29, 1
      %p215 = scmp.ne.s32.totalorder %s210, %s212
      %p216 = scmp.eq.s32.totalorder %s29, 0
      %p217 = por %p215, %p216
      %p218 = scmp.ne.s32.totalorder %s210, %s212
      %p219 = scmp.eq.s32.totalorder %s34, 1
      %p220 = por %p218, %p219
      %p221 = scmp.ne.s32.totalorder %s212, %s213
      %p222 = scmp.eq.s32.totalorder %s34, 0
      %p223 = por %p221, %p222
      %p224 = scmp.ne.s32.totalorder %s212, %s213
      %p225 = scmp.eq.s32.totalorder %s35, 1
      %p226 = por %p224, %p225
      %p228 = scmp.ne.s32.totalorder %s213, %s227
      %p229 = scmp.eq.s32.totalorder %s35, 0
      %p230 = por %p228, %p229
      %s232 = sadd.s32 %s231, 1
      %p235 = scmp.eq.s32.totalorder %s29, 1
      %p236 = scmp.ne.s32.totalorder %s231, %s233
      %p237 = scmp.eq.s32.totalorder %s29, 0
      %p238 = por %p236, %p237
      %p239 = scmp.ne.s32.totalorder %s231, %s233
      %p240 = scmp.eq.s32.totalorder %s34, 1
      %p241 = por %p239, %p240
      %p242 = scmp.ne.s32.totalorder %s233, %s234
      %p243 = scmp.eq.s32.totalorder %s34, 0
      %p244 = por %p242, %p243
      %p245 = scmp.ne.s32.totalorder %s233, %s234
      %p246 = scmp.eq.s32.totalorder %s35, 1
      %p247 = por %p245, %p246
      %p249 = scmp.ne.s32.totalorder %s234, %s248
      %p250 = scmp.eq.s32.totalorder %s35, 0
      %p251 = por %p249, %p250
      %s253 = sadd.s32 %s252, 1
      %p256 = scmp.eq.s32.totalorder %s29, 1
      %p257 = scmp.ne.s32.totalorder %s252, %s254
      %p258 = scmp.eq.s32.totalorder %s29, 0
      %p259 = por %p257, %p258
      %p260 = scmp.ne.s32.totalorder %s252, %s254
      %p261 = scmp.eq.s32.totalorder %s34, 1
      %p262 = por %p260, %p261
      %p263 = scmp.ne.s32.totalorder %s254, %s255
      %p264 = scmp.eq.s32.totalorder %s34, 0
      %p265 = por %p263, %p264
      %p266 = scmp.ne.s32.totalorder %s254, %s255
      %p267 = scmp.eq.s32.totalorder %s35, 1
      %p268 = por %p266, %p267
      %p270 = scmp.ne.s32.totalorder %s255, %s269
      %p271 = scmp.eq.s32.totalorder %s35, 0
      %p272 = por %p270, %p271
      %s274 = sadd.s32 %s273, 1
      %p277 = scmp.eq.s32.totalorder %s29, 1
      %p278 = scmp.ne.s32.totalorder %s273, %s275
      %p279 = scmp.eq.s32.totalorder %s29, 0
      %p280 = por %p278, %p279
      %p281 = scmp.ne.s32.totalorder %s273, %s275
      %p282 = scmp.eq.s32.totalorder %s34, 1
      %p283 = por %p281, %p282
      %p284 = scmp.ne.s32.totalorder %s275, %s276
      %p285 = scmp.eq.s32.totalorder %s34, 0
      %p286 = por %p284, %p285
      %p287 = scmp.ne.s32.totalorder %s275, %s276
      %p288 = scmp.eq.s32.totalorder %s35, 1
      %p289 = por %p287, %p288
      %p291 = scmp.ne.s32.totalorder %s276, %s290
      %p292 = scmp.eq.s32.totalorder %s35, 0
      %p293 = por %p291, %p292
      %s295 = sadd.s32 %s294, 1
      %p298 = scmp.eq.s32.totalorder %s29, 1
      %p299 = scmp.ne.s32.totalorder %s294, %s296
      %p300 = scmp.eq.s32.totalorder %s29, 0
      %p301 = por %p299, %p300
      %p302 = scmp.ne.s32.totalorder %s294, %s296
      %p303 = scmp.eq.s32.totalorder %s34, 1
      %p304 = por %p302, %p303
      %p305 = scmp.ne.s32.totalorder %s296, %s297
      %p306 = scmp.eq.s32.totalorder %s34, 0
      %p307 = por %p305, %p306
      %p308 = scmp.ne.s32.totalorder %s296, %s297
      %p309 = scmp.eq.s32.totalorder %s35, 1
      %p310 = por %p308, %p309
      %p312 = scmp.ne.s32.totalorder %s297, %s311
      %p313 = scmp.eq.s32.totalorder %s35, 0
      %p314 = por %p312, %p313
      %s316 = sadd.s32 %s315, 1
      %p319 = scmp.eq.s32.totalorder %s29, 1
      %p320 = scmp.ne.s32.totalorder %s315, %s317
      %p321 = scmp.eq.s32.totalorder %s29, 0
      %p322 = por %p320, %p321
      %p323 = scmp.ne.s32.totalorder %s315, %s317
      %p324 = scmp.eq.s32.totalorder %s34, 1
      %p325 = por %p323, %p324
      %p326 = scmp.ne.s32.totalorder %s317, %s318
      %p327 = scmp.eq.s32.totalorder %s34, 0
      %p328 = por %p326, %p327
      %p329 = scmp.ne.s32.totalorder %s317, %s318
      %p330 = scmp.eq.s32.totalorder %s35, 1
      %p331 = por %p329, %p330
      %p333 = scmp.ne.s32.totalorder %s318, %s332
      %p334 = scmp.eq.s32.totalorder %s35, 0
      %p335 = por %p333, %p334
      %s337 = sadd.s32 %s336, 1
      %p340 = scmp.eq.s32.totalorder %s29, 1
      %p341 = scmp.ne.s32.totalorder %s336, %s338
      %p342 = scmp.eq.s32.totalorder %s29, 0
      %p343 = por %p341, %p342
      %p344 = scmp.ne.s32.totalorder %s336, %s338
      %p345 = scmp.eq.s32.totalorder %s34, 1
      %p346 = por %p344, %p345
      %p347 = scmp.ne.s32.totalorder %s338, %s339
      %p348 = scmp.eq.s32.totalorder %s34, 0
      %p349 = por %p347, %p348
      %p350 = scmp.ne.s32.totalorder %s338, %s339
      %p351 = scmp.eq.s32.totalorder %s35, 1
      %p352 = por %p350, %p351
      %p354 = scmp.ne.s32.totalorder %s339, %s353
      %p355 = scmp.eq.s32.totalorder %s35, 0
      %p356 = por %p354, %p355
      %s358 = sadd.s32 %s357, 1
      %p361 = scmp.eq.s32.totalorder %s29, 1
      %p362 = scmp.ne.s32.totalorder %s357, %s359
      %p363 = scmp.eq.s32.totalorder %s29, 0
      %p364 = por %p362, %p363
      %p365 = scmp.ne.s32.totalorder %s357, %s359
      %p366 = scmp.eq.s32.totalorder %s34, 1
      %p367 = por %p365, %p366
      %p368 = scmp.ne.s32.totalorder %s359, %s360
      %p369 = scmp.eq.s32.totalorder %s34, 0
      %p370 = por %p368, %p369
      %p371 = scmp.ne.s32.totalorder %s359, %s360
      %p372 = scmp.eq.s32.totalorder %s35, 1
      %p373 = por %p371, %p372
      %p375 = scmp.ne.s32.totalorder %s360, %s374
      %p376 = scmp.eq.s32.totalorder %s35, 0
      %p377 = por %p375, %p376
      %s379 = sadd.s32 %s378, 1
      %p382 = scmp.eq.s32.totalorder %s29, 1
      %p383 = scmp.ne.s32.totalorder %s378, %s380
      %p384 = scmp.eq.s32.totalorder %s29, 0
      %p385 = por %p383, %p384
      %p386 = scmp.ne.s32.totalorder %s378, %s380
      %p387 = scmp.eq.s32.totalorder %s34, 1
      %p388 = por %p386, %p387
      %p389 = scmp.ne.s32.totalorder %s380, %s381
      %p390 = scmp.eq.s32.totalorder %s34, 0
      %p391 = por %p389, %p390
      %p392 = scmp.ne.s32.totalorder %s380, %s381
      %p393 = scmp.eq.s32.totalorder %s35, 1
      %p394 = por %p392, %p393
      %p396 = scmp.ne.s32.totalorder %s381, %s395
      %p397 = scmp.eq.s32.totalorder %s35, 0
      %p398 = por %p396, %p397
      %s400 = sadd.s32 %s399, 1
      %p403 = scmp.eq.s32.totalorder %s29, 1
      %p404 = scmp.ne.s32.totalorder %s399, %s401
      %p405 = scmp.eq.s32.totalorder %s29, 0
      %p406 = por %p404, %p405
      %p407 = scmp.ne.s32.totalorder %s399, %s401
      %p408 = scmp.eq.s32.totalorder %s34, 1
      %p409 = por %p407, %p408
      %p410 = scmp.ne.s32.totalorder %s401, %s402
      %p411 = scmp.eq.s32.totalorder %s34, 0
      %p412 = por %p410, %p411
      %p413 = scmp.ne.s32.totalorder %s401, %s402
      %p414 = scmp.eq.s32.totalorder %s35, 1
      %p415 = por %p413, %p414
      %p417 = scmp.ne.s32.totalorder %s402, %s416
      %p418 = scmp.eq.s32.totalorder %s35, 0
      %p419 = por %p417, %p418
      %s421 = sadd.s32 %s420, 1
      %p424 = scmp.eq.s32.totalorder %s29, 1
      %p425 = scmp.ne.s32.totalorder %s420, %s422
      %p426 = scmp.eq.s32.totalorder %s29, 0
      %p427 = por %p425, %p426
      %p428 = scmp.ne.s32.totalorder %s420, %s422
      %p429 = scmp.eq.s32.totalorder %s34, 1
      %p430 = por %p428, %p429
      %p431 = scmp.ne.s32.totalorder %s422, %s423
      %p432 = scmp.eq.s32.totalorder %s34, 0
      %p433 = por %p431, %p432
      %p434 = scmp.ne.s32.totalorder %s422, %s423
      %p435 = scmp.eq.s32.totalorder %s35, 1
      %p436 = por %p434, %p435
      %p438 = scmp.ne.s32.totalorder %s423, %s437
      %p439 = scmp.eq.s32.totalorder %s35, 0
      %p440 = por %p438, %p439
      %s442 = sadd.s32 %s441, 1
      %p445 = scmp.eq.s32.totalorder %s29, 1
      %p446 = scmp.ne.s32.totalorder %s441, %s443
      %p447 = scmp.eq.s32.totalorder %s29, 0
      %p448 = por %p446, %p447
      %p449 = scmp.ne.s32.totalorder %s441, %s443
      %p450 = scmp.eq.s32.totalorder %s34, 1
      %p451 = por %p449, %p450
      %p452 = scmp.ne.s32.totalorder %s443, %s444
      %p453 = scmp.eq.s32.totalorder %s34, 0
      %p454 = por %p452, %p453
      %p455 = scmp.ne.s32.totalorder %s443, %s444
      %p456 = scmp.eq.s32.totalorder %s35, 1
      %p457 = por %p455, %p456
      %p459 = scmp.ne.s32.totalorder %s444, %s458
      %p460 = scmp.eq.s32.totalorder %s35, 0
      %p461 = por %p459, %p460
      %s462 = ssub.s32 %s29, %s36
      %p463 = scmp.eq.s32.totalorder %s462, 0
      %s465 = sadd.s32 %s464, 1
      %s466 = scalar_select %p463, %s464, %s465
      %p469 = pneg %p463
      %p470 = scmp.eq.s32.totalorder %s29, 1
      %p471 = por %p469, %p470
      %p472 = scmp.ne.s32.totalorder %s464, %s467
      %p473 = scmp.eq.s32.totalorder %s29, 0
      %p474 = por %p472, %p473
      %p475 = scmp.ne.s32.totalorder %s464, %s467
      %p476 = scmp.eq.s32.totalorder %s34, 1
      %p477 = por %p475, %p476
      %p478 = scmp.ne.s32.totalorder %s467, %s468
      %p479 = scmp.eq.s32.totalorder %s34, 0
      %p480 = por %p478, %p479
      %p481 = scmp.ne.s32.totalorder %s467, %s468
      %p482 = scmp.eq.s32.totalorder %s35, 1
      %p483 = por %p481, %p482
      %p485 = scmp.ne.s32.totalorder %s468, %s484
      %p486 = scmp.eq.s32.totalorder %s35, 0
      %p487 = por %p485, %p486
      %p488 = scmp.le.s32.totalorder 1, %s29
      %p489 = scmp.lt.s32.totalorder %s29, 3
      %p490 = pnand %p488, %p489
      %p491 = pneg %p490
      // Predicated region
      $region9: #{tpu_custom_call.1} parent=5 // pred_check
        _
      $region10: #{tpu_custom_call.1} parent=5 // pred_check_branch
        %493 = sbr.rel (%p490) target = $region12
      $region11: #{tpu_custom_call.1} parent=5 // pred_region
        %s494 = ssub.s32 %s29, 1
        // Predicated region
        $region13: #{tpu_custom_call.1} parent=11 // pred_check
          %p495 = pneg %p76
        $region14: #{tpu_custom_call.1} parent=11 // pred_check_branch
          %497 = sbr.rel (%p495) target = $region16
        $region15: #{tpu_custom_call.1} parent=11 // pred_region
          _
        $region16: #{tpu_custom_call.1} parent=11 // pred_fallthru
          _
        // Predicated region
        $region17: #{tpu_custom_call.1} parent=11 // pred_check
          %p498 = pneg %p97
        $region18: #{tpu_custom_call.1} parent=11 // pred_check_branch
          %500 = sbr.rel (%p498) target = $region20
        $region19: #{tpu_custom_call.1} parent=11 // pred_region
          _
        $region20: #{tpu_custom_call.1} parent=11 // pred_fallthru
          _
        // Predicated region
        $region21: #{tpu_custom_call.1} parent=11 // pred_check
          %p501 = pneg %p118
        $region22: #{tpu_custom_call.1} parent=11 // pred_check_branch
          %503 = sbr.rel (%p501) target = $region24
        $region23: #{tpu_custom_call.1} parent=11 // pred_region
          _
        $region24: #{tpu_custom_call.1} parent=11 // pred_fallthru
          _
        // Predicated region
        $region25: #{tpu_custom_call.1} parent=11 // pred_check
          %p504 = pneg %p139
        $region26: #{tpu_custom_call.1} parent=11 // pred_check_branch
          %506 = sbr.rel (%p504) target = $region28
        $region27: #{tpu_custom_call.1} parent=11 // pred_region
          _
        $region28: #{tpu_custom_call.1} parent=11 // pred_fallthru
          _
        // Predicated region
        $region29: #{tpu_custom_call.1} parent=11 // pred_check
          %p507 = pneg %p160
        $region30: #{tpu_custom_call.1} parent=11 // pred_check_branch
          %509 = sbr.rel (%p507) target = $region32
        $region31: #{tpu_custom_call.1} parent=11 // pred_region
          _
        $region32: #{tpu_custom_call.1} parent=11 // pred_fallthru
          _
        // Predicated region
        $region33: #{tpu_custom_call.1} parent=11 // pred_check
          %p510 = pneg %p181
        $region34: #{tpu_custom_call.1} parent=11 // pred_check_branch
          %512 = sbr.rel (%p510) target = $region36
        $region35: #{tpu_custom_call.1} parent=11 // pred_region
          _
        $region36: #{tpu_custom_call.1} parent=11 // pred_fallthru
          _
        // Predicated region
        $region37: #{tpu_custom_call.1} parent=11 // pred_check
          %p513 = pneg %p202
        $region38: #{tpu_custom_call.1} parent=11 // pred_check_branch
          %515 = sbr.rel (%p513) target = $region40
        $region39: #{tpu_custom_call.1} parent=11 // pred_region
          _
        $region40: #{tpu_custom_call.1} parent=11 // pred_fallthru
          _
        // Predicated region
        $region41: #{tpu_custom_call.1} parent=11 // pred_check
          %p516 = pneg %p223
        $region42: #{tpu_custom_call.1} parent=11 // pred_check_branch
          %518 = sbr.rel (%p516) target = $region44
        $region43: #{tpu_custom_call.1} parent=11 // pred_region
          _
        $region44: #{tpu_custom_call.1} parent=11 // pred_fallthru
          _
        // Predicated region
        $region45: #{tpu_custom_call.1} parent=11 // pred_check
          %p519 = pneg %p244
        $region46: #{tpu_custom_call.1} parent=11 // pred_check_branch
          %521 = sbr.rel (%p519) target = $region48
        $region47: #{tpu_custom_call.1} parent=11 // pred_region
          _
        $region48: #{tpu_custom_call.1} parent=11 // pred_fallthru
          _
        // Predicated region
        $region49: #{tpu_custom_call.1} parent=11 // pred_check
          %p522 = pneg %p265
        $region50: #{tpu_custom_call.1} parent=11 // pred_check_branch
          %524 = sbr.rel (%p522) target = $region52
        $region51: #{tpu_custom_call.1} parent=11 // pred_region
          _
        $region52: #{tpu_custom_call.1} parent=11 // pred_fallthru
          _
        // Predicated region
        $region53: #{tpu_custom_call.1} parent=11 // pred_check
          %p525 = pneg %p286
        $region54: #{tpu_custom_call.1} parent=11 // pred_check_branch
          %527 = sbr.rel (%p525) target = $region56
        $region55: #{tpu_custom_call.1} parent=11 // pred_region
          _
        $region56: #{tpu_custom_call.1} parent=11 // pred_fallthru
          _
        // Predicated region
        $region57: #{tpu_custom_call.1} parent=11 // pred_check
          %p528 = pneg %p307
        $region58: #{tpu_custom_call.1} parent=11 // pred_check_branch
          %530 = sbr.rel (%p528) target = $region60
        $region59: #{tpu_custom_call.1} parent=11 // pred_region
          _
        $region60: #{tpu_custom_call.1} parent=11 // pred_fallthru
          _
        // Predicated region
        $region61: #{tpu_custom_call.1} parent=11 // pred_check
          %p531 = pneg %p328
        $region62: #{tpu_custom_call.1} parent=11 // pred_check_branch
          %533 = sbr.rel (%p531) target = $region64
        $region63: #{tpu_custom_call.1} parent=11 // pred_region
          _
        $region64: #{tpu_custom_call.1} parent=11 // pred_fallthru
          _
        // Predicated region
        $region65: #{tpu_custom_call.1} parent=11 // pred_check
          %p534 = pneg %p349
        $region66: #{tpu_custom_call.1} parent=11 // pred_check_branch
          %536 = sbr.rel (%p534) target = $region68
        $region67: #{tpu_custom_call.1} parent=11 // pred_region
          _
        $region68: #{tpu_custom_call.1} parent=11 // pred_fallthru
          _
        // Predicated region
        $region69: #{tpu_custom_call.1} parent=11 // pred_check
          %p537 = pneg %p370
        $region70: #{tpu_custom_call.1} parent=11 // pred_check_branch
          %539 = sbr.rel (%p537) target = $region72
        $region71: #{tpu_custom_call.1} parent=11 // pred_region
          _
        $region72: #{tpu_custom_call.1} parent=11 // pred_fallthru
          _
        // Predicated region
        $region73: #{tpu_custom_call.1} parent=11 // pred_check
          %p540 = pneg %p391
        $region74: #{tpu_custom_call.1} parent=11 // pred_check_branch
          %542 = sbr.rel (%p540) target = $region76
        $region75: #{tpu_custom_call.1} parent=11 // pred_region
          _
        $region76: #{tpu_custom_call.1} parent=11 // pred_fallthru
          _
        // Predicated region
        $region77: #{tpu_custom_call.1} parent=11 // pred_check
          %p543 = pneg %p412
        $region78: #{tpu_custom_call.1} parent=11 // pred_check_branch
          %545 = sbr.rel (%p543) target = $region80
        $region79: #{tpu_custom_call.1} parent=11 // pred_region
          _
        $region80: #{tpu_custom_call.1} parent=11 // pred_fallthru
          _
        // Predicated region
        $region81: #{tpu_custom_call.1} parent=11 // pred_check
          %p546 = pneg %p433
        $region82: #{tpu_custom_call.1} parent=11 // pred_check_branch
          %548 = sbr.rel (%p546) target = $region84
        $region83: #{tpu_custom_call.1} parent=11 // pred_region
          _
        $region84: #{tpu_custom_call.1} parent=11 // pred_fallthru
          _
        // Predicated region
        $region85: #{tpu_custom_call.1} parent=11 // pred_check
          %p549 = pneg %p454
        $region86: #{tpu_custom_call.1} parent=11 // pred_check_branch
          %551 = sbr.rel (%p549) target = $region88
        $region87: #{tpu_custom_call.1} parent=11 // pred_region
          _
        $region88: #{tpu_custom_call.1} parent=11 // pred_fallthru
          _
      $region12: #{tpu_custom_call.1} parent=5 // pred_fallthru
        _
      %p552 = scmp.lt.s32.totalorder %s29, 2
      // Predicated region
      $region89: #{tpu_custom_call.1} parent=5 // pred_check
        %p553 = pneg %p552
      $region90: #{tpu_custom_call.1} parent=5 // pred_check_branch
        %555 = sbr.rel (%p553) target = $region92
      $region91: #{tpu_custom_call.1} parent=5 // pred_region
        // Predicated region
        $region93: #{tpu_custom_call.1} parent=91 // pred_check
          %p556 = pneg %p49
        $region94: #{tpu_custom_call.1} parent=91 // pred_check_branch
          %558 = sbr.rel (%p556) target = $region96
        $region95: #{tpu_custom_call.1} parent=91 // pred_region
          %p559 = scmp.lt.s32.totalorder %s29, 1
          %s560 = scalar_select %p559, %s29, 1
          %s561 = smul.addr %s560, 2
          %s562 = smul.addr %s561, 8
          %s563 = scalar_lea.vmem %s0, %s562
        $region96: #{tpu_custom_call.1} parent=91 // pred_fallthru
          _
      $region92: #{tpu_custom_call.1} parent=5 // pred_fallthru
        _
      %p564 = scmp.le.s32.totalorder 1, %s29
      %p565 = scmp.lt.s32.totalorder %s29, 3
      %p566 = pnand %p564, %p565
      %p567 = pneg %p566
      // Predicated region
      $region97: #{tpu_custom_call.1} parent=5 // pred_check
        _
      $region98: #{tpu_custom_call.1} parent=5 // pred_check_branch
        %569 = sbr.rel (%p566) target = $region100
      $region99: #{tpu_custom_call.1} parent=5 // pred_region
        %s570 = ssub.s32 %s29, 1
        %p571 = scmp.lt.s32.totalorder %s34, 1
        %s572 = scalar_select %p571, %s34, 1
        %s573 = smul.addr %s572, 2
        %s574 = smul.addr %s573, 8
        %s575 = scalar_lea.vmem %s0, %s574
        %p576 = pneg %p55
        %p577 = pneg %p52
        %p578 = pneg %p76
        %p579 = pneg %p73
        %p580 = pneg %p97
        %p581 = pneg %p94
        %p582 = pneg %p118
        %p583 = pneg %p115
        %p584 = pneg %p139
        %p585 = pneg %p136
        %p586 = pneg %p160
        %p587 = pneg %p157
        %p588 = pneg %p181
        %p589 = pneg %p178
        %p590 = pneg %p202
        %p591 = pneg %p199
        %p592 = pneg %p223
        %p593 = pneg %p220
        %p594 = pneg %p244
        %p595 = pneg %p241
        %p596 = pneg %p265
        %p597 = pneg %p262
        %p598 = pneg %p286
        %p599 = pneg %p283
        %p600 = pneg %p307
        %p601 = pneg %p304
        %p602 = pneg %p328
        %p603 = pneg %p325
        %p604 = pneg %p349
        %p605 = pneg %p346
        %p606 = pneg %p370
        %p607 = pneg %p367
        %p608 = pneg %p391
        %p609 = pneg %p388
        %p610 = pneg %p412
        %p611 = pneg %p409
        %p612 = pneg %p433
        %p613 = pneg %p430
        %p614 = pneg %p454
        %p615 = pneg %p451
        %p616 = pneg %p480
        %p617 = pneg %p477
        %s618 = sand.u32 %s467, 1
        %s619 = scalar_lea.sflag [#allocation10], %s618
        %s620 = sand.u32 %s467, 1
        %s621 = scalar_lea.vmem [#allocation9], %s620
        %p622 = scmp.lt.s32.totalorder %s34, 1
        %s623 = scalar_select %p622, %s34, 1
        %s624 = smul.addr %s623, 2
        %s625 = smul.addr %s624, 8
        %s626 = scalar_lea.vmem %s0, %s625
        %v628 = vld [vmem:[%s626] sm:$0xff]
        %v629 = vld [vmem:[%s626 + $0x8] sm:$0xff]
        %v630 = vld [vmem:[%s1] sm:$0xf]
        %v631 = vld [vmem:[%s1 + $0x4] sm:$0xf]
        %v632 = vld [vmem:[%s1 + $0x8] sm:$0xf]
        %v633 = vld [vmem:[%s1 + $0xc] sm:$0xf]
        %v634 = vld [vmem:[%s1 + $0x10] sm:$0xf]
        %v635 = vld [vmem:[%s1 + $0x14] sm:$0xf]
        %vm636 = vcmask 130048
        %637 = vst.msk [vmem:[#allocation2] sm:$0xff] %vm636, 0.0
        %638 = vst.msk [vmem:[#allocation2 + $0x8] sm:$0xff] %vm636, 0.0
        %vm639 = vcmask 123904
        %640 = vst.msk [vmem:[#allocation2 + $0x10] sm:$0x3] %vm639, 0.0
        %641 = vst.msk [vmem:[#allocation2 + $0x1] sm:$0xff] %vm636, %v628
        %642 = vst.msk [vmem:[#allocation2 + $0x9] sm:$0xff] %vm636, %v629
        %v643 = vld [vmem:[#allocation2] sm:$0xff]
        %v644 = vld [vmem:[#allocation2 + $0x8] sm:$0xff]
        %v645 = vld [vmem:[#allocation2 + $0x10] sm:$0x3]
        %vm649 = vcmask 1046528
        %v650 = vrot.slane %v643, 1
        %v651 = vrot.slane %v644, 1
        %v652 = vsel %vm649, %v650, %v651
        %v653 = vrot.slane %v645, 1
        %v654 = vsel %vm649, %v651, %v653
        %655 = vrot.lane.b32.xlu0 %v652, 16
        %v656 = vpop.permute.xlu0 %655
        %657 = vrot.lane.b32.xlu0 %v654, 16
        %v658 = vpop.permute.xlu0 %657
        %vm661 = vcmask 1045504
        %v662 = vrot.slane %v643, 2
        %v663 = vrot.slane %v644, 2
        %v664 = vsel %vm661, %v662, %v663
        %v665 = vrot.slane %v645, 2
        %v666 = vsel %vm661, %v663, %v665
        %667 = vrot.lane.b32.xlu0 %v664, 32
        %v668 = vpop.permute.xlu0 %667
        %669 = vrot.lane.b32.xlu0 %v666, 32
        %v670 = vpop.permute.xlu0 %669
        %v673 = vsel %vm636, %v643, %v656
        %v674 = vsel %vm636, %v644, %v658
        %vm675 = vcmask 261120
        %v676 = vsel %vm675, %v673, %v668
        %v677 = vsel %vm675, %v674, %v670
        %v678 = vpack.c.bf16 %v677, %v676
        %v685 = vunpack.c.l.b16 %v630
        %v686 = vunpack.c.l.b16 %v631
        %v687 = vunpack.c.l.b16 %v632
        %v688 = vunpack.c.l.b16 %v633
        %v689 = vunpack.c.l.b16 %v634
        %v690 = vunpack.c.l.b16 %v635
        %v691 = vpack.c.b16 %v686, %v685
        %v692 = vpack.c.b16 %v688, %v687
        %v693 = vpack.c.b16 %v690, %v689
        %vm697 = vcmask 392192
        %v699 = vsel %vm697, %v678, 0
        %701 = vmatprep.subr.bf16.mxu0 0
        %702 = vmatpush1.bf16.msra.mxu0 %v691
        %703 = vmatprep.subr.bf16.mxu0 0
        %704 = vmatpush1.bf16.msra.mxu0 %v692
        %705 = vmatprep.subr.bf16.mxu0 0
        %706 = vmatpush1.bf16.msra.mxu0 %v693
        %707 = vmatprep.subr.bf16.mxu0 0
        %708 = vmatpush1.bf16.msra.mxu0 0
        %709 = vmatprep.subr.bf16.mxu0 0
        %710 = vmatpush1.bf16.msra.mxu0 0
        %711 = vmatprep.subr.bf16.mxu0 0
        %712 = vmatpush1.bf16.msra.mxu0 0
        %713 = vmatprep.subr.bf16.mxu0 0
        %714 = vmatpush1.bf16.msra.mxu0 0
        %715 = vmatprep.subr.bf16.mxu0 0
        %716 = vmatpush1.bf16.msra.mxu0 0
        %717 = vmatprep.subr.bf16.mxu0 0
        %718 = vmatpush1.bf16.msra.mxu0 0
        %719 = vmatprep.subr.bf16.mxu0 0
        %720 = vmatpush1.bf16.msra.mxu0 0
        %721 = vmatprep.subr.bf16.mxu0 0
        %722 = vmatpush1.bf16.msra.mxu0 0
        %723 = vmatprep.subr.bf16.mxu0 0
        %724 = vmatpush1.bf16.msra.mxu0 0
        %725 = vmatprep.subr.bf16.mxu0 0
        %726 = vmatpush1.bf16.msra.mxu0 0
        %727 = vmatprep.subr.bf16.mxu0 0
        %728 = vmatpush1.bf16.msra.mxu0 0
        %729 = vmatprep.subr.bf16.mxu0 0
        %730 = vmatpush1.bf16.msra.mxu0 0
        %731 = vmatprep.subr.bf16.mxu0 0
        %732 = vmatpush1.bf16.msra.mxu0 0
        %733 = vmatprep.mubr.bf16.mxu0 0
        %734 = vmatmul.mubr.bf16.gmra.mrb[0].mxu0 %v699
        %v735 = vpop.f32.mrb[0].mxu0
        %v736 = vadd.f32 0.0, %v735
        %v737 = vpop.f32.mrb[0].mxu0
        %v738 = vpop.f32.mrb[0].mxu0
        %v739 = vadd.f32 0.0, %v738
        %v740 = vpop.f32.mrb[0].mxu0
        %741 = vdwg.mxu0
        %v742 = vld [vmem:[%s2] sm:$0xf]
        %v743 = vld [vmem:[%s2 + $0x4] sm:$0xf]
        %v744 = vld [vmem:[%s2 + $0x8] sm:$0xf]
        %v745 = vld [vmem:[%s2 + $0xc] sm:$0xf]
        %v746 = vld [vmem:[%s2 + $0x10] sm:$0xf]
        %v747 = vld [vmem:[%s2 + $0x14] sm:$0xf]
        %v748 = vld [vmem:[%s2 + $0x18] sm:$0xf]
        %v749 = vld [vmem:[%s2 + $0x1c] sm:$0xf]
        %v750 = vld [vmem:[%s2 + $0x20] sm:$0xf]
        %v751 = vld [vmem:[%s2 + $0x24] sm:$0xf]
        %v752 = vld [vmem:[%s2 + $0x28] sm:$0xf]
        %v753 = vld [vmem:[%s2 + $0x2c] sm:$0xf]
        %v754 = vld [vmem:[%s2 + $0x30] sm:$0xf]
        %v755 = vld [vmem:[%s2 + $0x34] sm:$0xf]
        %v756 = vld [vmem:[%s2 + $0x38] sm:$0xf]
        %v757 = vld [vmem:[%s2 + $0x3c] sm:$0xf]
        %v758 = vld [vmem:[%s2 + $0x40] sm:$0xf]
        %v759 = vld [vmem:[%s2 + $0x44] sm:$0xf]
        %v760 = vld [vmem:[%s3] sm:$0x1]
        %v761 = vld [vmem:[%s4] sm:$0xf]
        %v762 = vld [vmem:[%s4 + $0x4] sm:$0xf]
        %v763 = vld [vmem:[%s4 + $0x8] sm:$0xf]
        %v764 = vld [vmem:[%s4 + $0xc] sm:$0xf]
        %v765 = vld [vmem:[%s4 + $0x10] sm:$0xf]
        %v766 = vld [vmem:[%s4 + $0x14] sm:$0xf]
        %v767 = vld [vmem:[%s4 + $0x18] sm:$0xf]
        %v768 = vld [vmem:[%s4 + $0x1c] sm:$0xf]
        %v769 = vld [vmem:[%s4 + $0x20] sm:$0xf]
        %v770 = vld [vmem:[%s4 + $0x24] sm:$0xf]
        %v771 = vld [vmem:[%s4 + $0x28] sm:$0xf]
        %v772 = vld [vmem:[%s4 + $0x2c] sm:$0xf]
        %v773 = vld [vmem:[%s4 + $0x30] sm:$0xf]
        %v774 = vld [vmem:[%s4 + $0x34] sm:$0xf]
        %v775 = vld [vmem:[%s4 + $0x38] sm:$0xf]
        %v776 = vld [vmem:[%s4 + $0x3c] sm:$0xf]
        %v777 = vld [vmem:[%s4 + $0x40] sm:$0xf]
        %v778 = vld [vmem:[%s4 + $0x44] sm:$0xf]
        %v779 = vld [vmem:[%s4 + $0x48] sm:$0xf]
        %v780 = vld [vmem:[%s4 + $0x4c] sm:$0xf]
        %v781 = vld [vmem:[%s4 + $0x50] sm:$0xf]
        %v782 = vld [vmem:[%s4 + $0x54] sm:$0xf]
        %v783 = vld [vmem:[%s4 + $0x58] sm:$0xf]
        %v784 = vld [vmem:[%s4 + $0x5c] sm:$0xf]
        %v785 = vld [vmem:[%s4 + $0x60] sm:$0xf]
        %v786 = vld [vmem:[%s4 + $0x64] sm:$0xf]
        %v787 = vld [vmem:[%s4 + $0x68] sm:$0xf]
        %v788 = vld [vmem:[%s5] sm:$0x1]
        %v789 = vld [vmem:[%s6] sm:$0xf]
        %v790 = vld [vmem:[%s6 + $0x4] sm:$0xf]
        %v791 = vld [vmem:[%s7] sm:$0x1]
        %792 = vst.msk [vmem:[#allocation3] sm:$0xff] %vm636, 0.0
        %793 = vst.msk [vmem:[#allocation3 + $0x8] sm:$0xff] %vm636, 0.0
        %794 = vst.msk [vmem:[#allocation3 + $0x10] sm:$0xff] %vm636, 0.0
        %795 = vst.msk [vmem:[#allocation3 + $0x4] sm:$0xff] %vm636, %v736
        %796 = vst.msk [vmem:[#allocation3 + $0xc] sm:$0xff] %vm636, %v739
        %v797 = vld [vmem:[#allocation3] sm:$0xff]
        %v798 = vld [vmem:[#allocation3 + $0x8] sm:$0xff]
        %v799 = vld [vmem:[#allocation3 + $0x10] sm:$0xff]
        %v803 = vrot.slane %v797, 1
        %v804 = vrot.slane %v798, 1
        %v805 = vsel %vm649, %v803, %v804
        %v806 = vrot.slane %v799, 1
        %v807 = vsel %vm649, %v804, %v806
        %808 = vrot.lane.b32.xlu0 %v805, 16
        %v809 = vpop.permute.xlu0 %808
        %810 = vrot.lane.b32.xlu0 %v807, 16
        %v811 = vpop.permute.xlu0 %810
        %v814 = vrot.slane %v797, 2
        %v815 = vrot.slane %v798, 2
        %v816 = vsel %vm661, %v814, %v815
        %v817 = vrot.slane %v799, 2
        %v818 = vsel %vm661, %v815, %v817
        %819 = vrot.lane.b32.xlu0 %v816, 32
        %v820 = vpop.permute.xlu0 %819
        %821 = vrot.lane.b32.xlu0 %v818, 32
        %v822 = vpop.permute.xlu0 %821
        %vm825 = vcmask 1044480
        %v826 = vrot.slane %v797, 3
        %v827 = vrot.slane %v798, 3
        %v828 = vsel %vm825, %v826, %v827
        %v829 = vrot.slane %v799, 3
        %v830 = vsel %vm825, %v827, %v829
        %831 = vrot.lane.b32.xlu0 %v828, 48
        %v832 = vpop.permute.xlu0 %831
        %833 = vrot.lane.b32.xlu0 %v830, 48
        %v834 = vpop.permute.xlu0 %833
        %vm837 = vcmask 1043456
        %v838 = vrot.slane %v797, 4
        %v839 = vrot.slane %v798, 4
        %v840 = vsel %vm837, %v838, %v839
        %v841 = vrot.slane %v799, 4
        %v842 = vsel %vm837, %v839, %v841
        %843 = vrot.lane.b32.xlu0 %v840, 64
        %v844 = vpop.permute.xlu0 %843
        %845 = vrot.lane.b32.xlu0 %v842, 64
        %v846 = vpop.permute.xlu0 %845
        %vm849 = vcmask 1042432
        %v850 = vrot.slane %v797, 5
        %v851 = vrot.slane %v798, 5
        %v852 = vsel %vm849, %v850, %v851
        %v853 = vrot.slane %v799, 5
        %v854 = vsel %vm849, %v851, %v853
        %855 = vrot.lane.b32.xlu0 %v852, 80
        %v856 = vpop.permute.xlu0 %855
        %857 = vrot.lane.b32.xlu0 %v854, 80
        %v858 = vpop.permute.xlu0 %857
        %vm861 = vcmask 1041408
        %v862 = vrot.slane %v797, 6
        %v863 = vrot.slane %v798, 6
        %v864 = vsel %vm861, %v862, %v863
        %v865 = vrot.slane %v799, 6
        %v866 = vsel %vm861, %v863, %v865
        %867 = vrot.lane.b32.xlu0 %v864, 96
        %v868 = vpop.permute.xlu0 %867
        %869 = vrot.lane.b32.xlu0 %v866, 96
        %v870 = vpop.permute.xlu0 %869
        %vm873 = vcmask 1040384
        %v874 = vrot.slane %v797, 7
        %v875 = vrot.slane %v798, 7
        %v876 = vsel %vm873, %v874, %v875
        %v877 = vrot.slane %v799, 7
        %v878 = vsel %vm873, %v875, %v877
        %879 = vrot.lane.b32.xlu0 %v876, 112
        %v880 = vpop.permute.xlu0 %879
        %881 = vrot.lane.b32.xlu0 %v878, 112
        %v882 = vpop.permute.xlu0 %881
        %v885 = vsel %vm636, %v797, %v809
        %v886 = vsel %vm636, %v798, %v811
        %v887 = vsel %vm675, %v885, %v820
        %v888 = vsel %vm675, %v886, %v822
        %v889 = vsel %vm697, %v887, %v832
        %v890 = vsel %vm697, %v888, %v834
        %vm891 = vcmask 523264
        %v892 = vsel %vm891, %v889, %v844
        %v893 = vsel %vm891, %v890, %v846
        %vm894 = vcmask 654336
        %v895 = vsel %vm894, %v892, %v856
        %v896 = vsel %vm894, %v893, %v858
        %vm897 = vcmask 785408
        %v898 = vsel %vm897, %v895, %v868
        %v899 = vsel %vm897, %v896, %v870
        %vm900 = vcmask 916480
        %v901 = vsel %vm900, %v898, %v880
        %v902 = vsel %vm900, %v899, %v882
        %v903 = vlaneseq
        %v904 = vshrl.u32 %v903, 7
        %v905 = vlaneseq
        %v906 = vand.u32 %v905, 127
        %v907 = vmul.u32 %v904, 2
        %vm908 = vcmp.eq.s32.totalorder %v906, %v907
        %v909 = vsel %vm908, 1, 0
        %v910 = vcvt.s32.f32 %v909
        %v911 = vpack.c.bf16 %v910, %v910
        %v912 = vpack.c.bf16 %v902, %v901
        %v913 = vpack.c.bf16 %v799, %v798
        %v915 = vsel %vm636, %v911, 0
        %917 = vmatprep.subr.bf16.mxu0 %v913
        %918 = vmatpush1.bf16.msra.mxu0 %v912
        %919 = vmatprep.subr.bf16.mxu0 0
        %920 = vmatpush1.bf16.msra.mxu0 0
        %921 = vmatprep.subr.bf16.mxu0 0
        %922 = vmatpush1.bf16.msra.mxu0 0
        %923 = vmatprep.subr.bf16.mxu0 0
        %924 = vmatpush1.bf16.msra.mxu0 0
        %925 = vmatprep.subr.bf16.mxu0 0
        %926 = vmatpush1.bf16.msra.mxu0 0
        %927 = vmatprep.subr.bf16.mxu0 0
        %928 = vmatpush1.bf16.msra.mxu0 0
        %929 = vmatprep.subr.bf16.mxu0 0
        %930 = vmatpush1.bf16.msra.mxu0 0
        %931 = vmatprep.subr.bf16.mxu0 0
        %932 = vmatpush1.bf16.msra.mxu0 0
        %933 = vmatprep.subr.bf16.mxu0 0
        %934 = vmatpush1.bf16.msra.mxu0 0
        %935 = vmatprep.subr.bf16.mxu0 0
        %936 = vmatpush1.bf16.msra.mxu0 0
        %937 = vmatprep.subr.bf16.mxu0 0
        %938 = vmatpush1.bf16.msra.mxu0 0
        %939 = vmatprep.subr.bf16.mxu0 0
        %940 = vmatpush1.bf16.msra.mxu0 0
        %941 = vmatprep.subr.bf16.mxu0 0
        %942 = vmatpush1.bf16.msra.mxu0 0
        %943 = vmatprep.subr.bf16.mxu0 0
        %944 = vmatpush1.bf16.msra.mxu0 0
        %945 = vmatprep.subr.bf16.mxu0 0
        %946 = vmatpush1.bf16.msra.mxu0 0
        %947 = vmatprep.subr.bf16.mxu0 0
        %948 = vmatpush1.bf16.msra.mxu0 0
        %949 = vmatprep.mubr.bf16.mxu0 0
        %950 = vmatmul.mubr.bf16.gmra.mrb[0].mxu0 %v915
        %v951 = vpop.f32.mrb[0].mxu0
        %v952 = vadd.f32 0.0, %v951
        %v953 = vpop.f32.mrb[0].mxu0
        %v954 = vadd.f32 0.0, %v953
        %v955 = vpop.f32.mrb[0].mxu0
        %v956 = vpop.f32.mrb[0].mxu0
        %957 = vdwg.mxu0
        %v958 = vpack.c.bf16 %v952, %v952
        %v959 = vpack.c.bf16 %v954, %v954
        %v961 = vlaneseq
        %v962 = vshrl.u32 %v961, 7
        %v963 = vsub.s32 0, %v962
        %v964 = vrot.slane %v760, %v963
        %v984 = vunpack.c.l.b16 %v742
        %v985 = vunpack.c.l.b16 %v743
        %v986 = vunpack.c.l.b16 %v744
        %v987 = vunpack.c.l.b16 %v745
        %v988 = vunpack.c.l.b16 %v746
        %v989 = vunpack.c.l.b16 %v747
        %v990 = vunpack.c.l.b16 %v748
        %v991 = vunpack.c.l.b16 %v749
        %v992 = vunpack.c.l.b16 %v750
        %v993 = vunpack.c.l.b16 %v751
        %v994 = vunpack.c.l.b16 %v752
        %v995 = vunpack.c.l.b16 %v753
        %v996 = vunpack.c.l.b16 %v754
        %v997 = vunpack.c.l.b16 %v755
        %v998 = vunpack.c.l.b16 %v756
        %v999 = vunpack.c.l.b16 %v757
        %v1000 = vunpack.c.l.b16 %v758
        %v1001 = vunpack.c.l.b16 %v759
        %v1002 = vpack.c.b16 %v985, %v984
        %v1003 = vpack.c.b16 %v987, %v986
        %v1004 = vpack.c.b16 %v989, %v988
        %v1005 = vpack.c.b16 %v991, %v990
        %v1006 = vpack.c.b16 %v993, %v992
        %v1007 = vpack.c.b16 %v995, %v994
        %v1008 = vpack.c.b16 %v997, %v996
        %v1009 = vpack.c.b16 %v999, %v998
        %v1010 = vpack.c.b16 %v1001, %v1000
        %v1021 = vsel %vm636, %v959, 0
        %1023 = vmatprep.subr.bf16.mxu0 0
        %1024 = vmatpush1.bf16.msra.mxu0 %v1002
        %1025 = vmatprep.subr.bf16.mxu0 0
        %1026 = vmatpush1.bf16.msra.mxu0 %v1003
        %1027 = vmatprep.subr.bf16.mxu0 0
        %1028 = vmatpush1.bf16.msra.mxu0 %v1004
        %1029 = vmatprep.subr.bf16.mxu0 0
        %1030 = vmatpush1.bf16.msra.mxu0 %v1005
        %1031 = vmatprep.subr.bf16.mxu0 0
        %1032 = vmatpush1.bf16.msra.mxu0 %v1006
        %1033 = vmatprep.subr.bf16.mxu0 0
        %1034 = vmatpush1.bf16.msra.mxu0 %v1007
        %1035 = vmatprep.subr.bf16.mxu0 0
        %1036 = vmatpush1.bf16.msra.mxu0 %v1008
        %1037 = vmatprep.subr.bf16.mxu0 0
        %1038 = vmatpush1.bf16.msra.mxu0 %v1009
        %1039 = vmatprep.subr.bf16.mxu0 0
        %1040 = vmatpush1.bf16.msra.mxu0 %v1010
        %1041 = vmatprep.subr.bf16.mxu0 0
        %1042 = vmatpush1.bf16.msra.mxu0 0
        %1043 = vmatprep.subr.bf16.mxu0 0
        %1044 = vmatpush1.bf16.msra.mxu0 0
        %1045 = vmatprep.subr.bf16.mxu0 0
        %1046 = vmatpush1.bf16.msra.mxu0 0
        %1047 = vmatprep.subr.bf16.mxu0 0
        %1048 = vmatpush1.bf16.msra.mxu0 0
        %1049 = vmatprep.subr.bf16.mxu0 0
        %1050 = vmatpush1.bf16.msra.mxu0 0
        %1051 = vmatprep.subr.bf16.mxu0 0
        %1052 = vmatpush1.bf16.msra.mxu0 0
        %1053 = vmatprep.subr.bf16.mxu0 0
        %1054 = vmatpush1.bf16.msra.mxu0 0
        %1055 = vmatprep.mubr.bf16.mxu0 %v1021
        %1056 = vmatmul.mubr.bf16.gmra.mrb[0].mxu0 %v958
        %v1057 = vpop.f32.mrb[0].mxu0
        %v1058 = vadd.f32 %v964, %v1057
        %v1059 = vpop.f32.mrb[0].mxu0
        %v1060 = vpop.f32.mrb[0].mxu0
        %v1061 = vpop.f32.mrb[0].mxu0
        %1062 = vdwg.mxu0
        %v1063 = vmax.f32 %v1058, 0.0
        %v1065 = vlaneseq
        %v1066 = vshrl.u32 %v1065, 7
        %v1067 = vsub.s32 0, %v1066
        %v1068 = vrot.slane %v791, %v1067
        %1071 = vrot.lane.b32.xlu0 %v958, 64
        %v1072 = vpop.permute.xlu0 %1071
        %v1075 = vunpack.c.l.b16 %v789
        %v1076 = vunpack.c.l.b16 %v790
        %v1077 = vpack.c.b16 %v1076, %v1075
        %v1080 = vsel %vm636, %v1072, 0
        %1082 = vmatprep.subr.bf16.mxu0 0
        %1083 = vmatpush1.bf16.msra.mxu0 %v1077
        %1084 = vmatprep.subr.bf16.mxu0 0
        %1085 = vmatpush1.bf16.msra.mxu0 0
        %1086 = vmatprep.subr.bf16.mxu0 0
        %1087 = vmatpush1.bf16.msra.mxu0 0
        %1088 = vmatprep.subr.bf16.mxu0 0
        %1089 = vmatpush1.bf16.msra.mxu0 0
        %1090 = vmatprep.subr.bf16.mxu0 0
        %1091 = vmatpush1.bf16.msra.mxu0 0
        %1092 = vmatprep.subr.bf16.mxu0 0
        %1093 = vmatpush1.bf16.msra.mxu0 0
        %1094 = vmatprep.subr.bf16.mxu0 0
        %1095 = vmatpush1.bf16.msra.mxu0 0
        %1096 = vmatprep.subr.bf16.mxu0 0
        %1097 = vmatpush1.bf16.msra.mxu0 0
        %1098 = vmatprep.subr.bf16.mxu0 0
        %1099 = vmatpush1.bf16.msra.mxu0 0
        %1100 = vmatprep.subr.bf16.mxu0 0
        %1101 = vmatpush1.bf16.msra.mxu0 0
        %1102 = vmatprep.subr.bf16.mxu0 0
        %1103 = vmatpush1.bf16.msra.mxu0 0
        %1104 = vmatprep.subr.bf16.mxu0 0
        %1105 = vmatpush1.bf16.msra.mxu0 0
        %1106 = vmatprep.subr.bf16.mxu0 0
        %1107 = vmatpush1.bf16.msra.mxu0 0
        %1108 = vmatprep.subr.bf16.mxu0 0
        %1109 = vmatpush1.bf16.msra.mxu0 0
        %1110 = vmatprep.subr.bf16.mxu0 0
        %1111 = vmatpush1.bf16.msra.mxu0 0
        %1112 = vmatprep.subr.bf16.mxu0 0
        %1113 = vmatpush1.bf16.msra.mxu0 0
        %1114 = vmatprep.mubr.bf16.mxu0 0
        %1115 = vmatmul.mubr.bf16.gmra.mrb[0].mxu0 %v1080
        %v1116 = vpop.f32.mrb[0].mxu0
        %v1117 = vadd.f32 %v1068, %v1116
        %v1118 = vpop.f32.mrb[0].mxu0
        %v1119 = vpop.f32.mrb[0].mxu0
        %v1120 = vpop.f32.mrb[0].mxu0
        %1121 = vdwg.mxu0
        %v1122 = vmax.f32 %v1117, 0.0
        %vm1123 = vcmask 195584
        %1124 = vst.msk [vmem:[#allocation4] sm:$0xff] %vm1123, 0.0
        %1125 = vst.msk [vmem:[#allocation4 + $0x8] sm:$0xff] %vm1123, 0.0
        %1126 = vst.msk [vmem:[#allocation4 + $0x4] sm:$0xff] %vm1123, %v1063
        %v1127 = vld [vmem:[#allocation4] sm:$0xff]
        %v1128 = vld [vmem:[#allocation4 + $0x8] sm:$0xff]
        %v1131 = vrot.slane %v1127, 1
        %v1132 = vrot.slane %v1128, 1
        %v1133 = vsel %vm649, %v1131, %v1132
        %1134 = vrot.lane.b32.xlu0 %v1133, 24
        %v1135 = vpop.permute.xlu0 %1134
        %v1137 = vrot.slane %v1127, 2
        %v1138 = vrot.slane %v1128, 2
        %v1139 = vsel %vm661, %v1137, %v1138
        %1140 = vrot.lane.b32.xlu0 %v1139, 48
        %v1141 = vpop.permute.xlu0 %1140
        %v1143 = vrot.slane %v1127, 3
        %v1144 = vrot.slane %v1128, 3
        %v1145 = vsel %vm825, %v1143, %v1144
        %1146 = vrot.lane.b32.xlu0 %v1145, 72
        %v1147 = vpop.permute.xlu0 %1146
        %v1149 = vrot.slane %v1127, 4
        %v1150 = vrot.slane %v1128, 4
        %v1151 = vsel %vm837, %v1149, %v1150
        %1152 = vrot.lane.b32.xlu0 %v1151, 96
        %v1153 = vpop.permute.xlu0 %1152
        %v1155 = vrot.slane %v1127, 5
        %v1156 = vrot.slane %v1128, 5
        %v1157 = vsel %vm849, %v1155, %v1156
        %1158 = vrot.lane.b32.xlu0 %v1157, 120
        %v1159 = vpop.permute.xlu0 %1158
        %v1161 = vrot.slane %v1127, 6
        %v1162 = vrot.slane %v1128, 6
        %v1163 = vsel %vm861, %v1161, %v1162
        %1164 = vrot.lane.b32.xlu0 %v1163, 16
        %v1165 = vpop.permute.xlu0 %1164
        %v1167 = vrot.slane %v1127, 7
        %v1168 = vrot.slane %v1128, 7
        %v1169 = vsel %vm873, %v1167, %v1168
        %1170 = vrot.lane.b32.xlu0 %v1169, 40
        %v1171 = vpop.permute.xlu0 %1170
        %1173 = vrot.lane.b32.xlu0 %v1128, 64
        %v1174 = vpop.permute.xlu0 %1173
        %v1176 = vsel %vm1123, %v1127, %v1135
        %v1177 = vsel %vm697, %v1176, %v1141
        %vm1178 = vcmask 588800
        %v1179 = vsel %vm1178, %v1177, %v1147
        %v1180 = vsel %vm897, %v1179, %v1153
        %vm1181 = vcmask 982016
        %v1182 = vsel %vm1181, %v1180, %v1159
        %v1183 = vsel %vm636, %v1159, %v1165
        %vm1184 = vcmask 326656
        %v1185 = vsel %vm1184, %v1183, %v1171
        %v1186 = vsel %vm891, %v1185, %v1174
        %v1187 = vpack.c.bf16 %v1182, %v1182
        %v1188 = vpack.c.bf16 %v1186, %v1186
        %v1190 = vlaneseq
        %v1191 = vshrl.u32 %v1190, 7
        %v1192 = vsub.s32 0, %v1191
        %v1193 = vrot.slane %v788, %v1192
        %v1222 = vunpack.c.l.b16 %v761
        %v1223 = vunpack.c.l.b16 %v762
        %v1224 = vunpack.c.l.b16 %v763
        %v1225 = vunpack.c.l.b16 %v764
        %v1226 = vunpack.c.l.b16 %v765
        %v1227 = vunpack.c.l.b16 %v766
        %v1228 = vunpack.c.l.b16 %v767
        %v1229 = vunpack.c.l.b16 %v768
        %v1230 = vunpack.c.l.b16 %v769
        %v1231 = vunpack.c.l.b16 %v770
        %v1232 = vunpack.c.l.b16 %v771
        %v1233 = vunpack.c.l.b16 %v772
        %v1234 = vunpack.c.l.b16 %v773
        %v1235 = vunpack.c.l.b16 %v774
        %v1236 = vunpack.c.l.b16 %v775
        %v1237 = vunpack.c.l.b16 %v776
        %v1238 = vunpack.c.l.b16 %v777
        %v1239 = vunpack.c.l.b16 %v778
        %v1240 = vunpack.c.l.b16 %v779
        %v1241 = vunpack.c.l.b16 %v780
        %v1242 = vunpack.c.l.b16 %v781
        %v1243 = vunpack.c.l.b16 %v782
        %v1244 = vunpack.c.l.b16 %v783
        %v1245 = vunpack.c.l.b16 %v784
        %v1246 = vunpack.c.l.b16 %v785
        %v1247 = vunpack.c.l.b16 %v786
        %v1248 = vunpack.c.l.b16 %v787
        %v1249 = vpack.c.b16 %v1223, %v1222
        %v1250 = vpack.c.b16 %v1225, %v1224
        %v1251 = vpack.c.b16 %v1227, %v1226
        %v1252 = vpack.c.b16 %v1229, %v1228
        %v1253 = vpack.c.b16 %v1231, %v1230
        %v1254 = vpack.c.b16 %v1233, %v1232
        %v1255 = vpack.c.b16 %v1235, %v1234
        %v1256 = vpack.c.b16 %v1237, %v1236
        %v1257 = vpack.c.b16 %v1239, %v1238
        %v1258 = vpack.c.b16 %v1241, %v1240
        %v1259 = vpack.c.b16 %v1243, %v1242
        %v1260 = vpack.c.b16 %v1245, %v1244
        %v1261 = vpack.c.b16 %v1247, %v1246
        %v1262 = vpack.c.b16 %v1248, %v1248
        %vm1276 = vcmask 719872
        %v1278 = vsel %vm1276, %v1188, 0
        %v1281 = vsel %vm837, %v1262, 0
        %1283 = vmatprep.subr.bf16.mxu0 0
        %1284 = vmatpush1.bf16.msra.mxu0 %v1249
        %1285 = vmatprep.subr.bf16.mxu0 0
        %1286 = vmatpush1.bf16.msra.mxu0 %v1250
        %1287 = vmatprep.subr.bf16.mxu0 0
        %1288 = vmatpush1.bf16.msra.mxu0 %v1251
        %1289 = vmatprep.subr.bf16.mxu0 0
        %1290 = vmatpush1.bf16.msra.mxu0 %v1252
        %1291 = vmatprep.subr.bf16.mxu0 0
        %1292 = vmatpush1.bf16.msra.mxu0 %v1253
        %1293 = vmatprep.subr.bf16.mxu0 0
        %1294 = vmatpush1.bf16.msra.mxu0 %v1254
        %1295 = vmatprep.subr.bf16.mxu0 0
        %1296 = vmatpush1.bf16.msra.mxu0 %v1255
        %1297 = vmatprep.subr.bf16.mxu0 0
        %1298 = vmatpush1.bf16.msra.mxu0 %v1256
        %1299 = vmatprep.subr.bf16.mxu0 0
        %1300 = vmatpush1.bf16.msra.mxu0 %v1257
        %1301 = vmatprep.subr.bf16.mxu0 0
        %1302 = vmatpush1.bf16.msra.mxu0 %v1258
        %1303 = vmatprep.subr.bf16.mxu0 0
        %1304 = vmatpush1.bf16.msra.mxu0 %v1259
        %1305 = vmatprep.subr.bf16.mxu0 0
        %1306 = vmatpush1.bf16.msra.mxu0 %v1260
        %1307 = vmatprep.subr.bf16.mxu0 0
        %1308 = vmatpush1.bf16.msra.mxu0 %v1261
        %1309 = vmatprep.subr.bf16.mxu0 0
        %1310 = vmatpush1.bf16.msra.mxu0 %v1281
        %1311 = vmatprep.subr.bf16.mxu0 0
        %1312 = vmatpush1.bf16.msra.mxu0 0
        %1313 = vmatprep.subr.bf16.mxu0 0
        %1314 = vmatpush1.bf16.msra.mxu0 0
        %1315 = vmatprep.mubr.bf16.mxu0 %v1278
        %1316 = vmatmul.mubr.bf16.gmra.mrb[0].mxu0 %v1187
        %v1317 = vpop.f32.mrb[0].mxu0
        %v1318 = vadd.f32 %v1193, %v1317
        %v1319 = vpop.f32.mrb[0].mxu0
        %v1320 = vpop.f32.mrb[0].mxu0
        %v1321 = vpop.f32.mrb[0].mxu0
        %1322 = vdwg.mxu0
        %v1323 = vadd.f32 %v1318, %v1122
        %v1324 = vmax.f32 %v1323, 0.0
        %v1325 = vld [vmem:[%s8] sm:$0xf]
        %v1326 = vld [vmem:[%s8 + $0x4] sm:$0xf]
        %v1327 = vld [vmem:[%s8 + $0x8] sm:$0xf]
        %v1328 = vld [vmem:[%s8 + $0xc] sm:$0xf]
        %v1329 = vld [vmem:[%s8 + $0x10] sm:$0xf]
        %v1330 = vld [vmem:[%s8 + $0x14] sm:$0xf]
        %v1331 = vld [vmem:[%s8 + $0x18] sm:$0xf]
        %v1332 = vld [vmem:[%s8 + $0x1c] sm:$0xf]
        %v1333 = vld [vmem:[%s8 + $0x20] sm:$0xf]
        %v1334 = vld [vmem:[%s8 + $0x24] sm:$0xf]
        %v1335 = vld [vmem:[%s8 + $0x28] sm:$0xf]
        %v1336 = vld [vmem:[%s8 + $0x2c] sm:$0xf]
        %v1337 = vld [vmem:[%s8 + $0x30] sm:$0xf]
        %v1338 = vld [vmem:[%s8 + $0x34] sm:$0xf]
        %v1339 = vld [vmem:[%s8 + $0x38] sm:$0xf]
        %v1340 = vld [vmem:[%s8 + $0x3c] sm:$0xf]
        %v1341 = vld [vmem:[%s8 + $0x40] sm:$0xf]
        %v1342 = vld [vmem:[%s8 + $0x44] sm:$0xf]
        %v1343 = vld [vmem:[%s8 + $0x48] sm:$0xf]
        %v1344 = vld [vmem:[%s8 + $0x4c] sm:$0xf]
        %v1345 = vld [vmem:[%s8 + $0x50] sm:$0xf]
        %v1346 = vld [vmem:[%s8 + $0x54] sm:$0xf]
        %v1347 = vld [vmem:[%s8 + $0x58] sm:$0xf]
        %v1348 = vld [vmem:[%s8 + $0x5c] sm:$0xf]
        %v1349 = vld [vmem:[%s8 + $0x60] sm:$0xf]
        %v1350 = vld [vmem:[%s8 + $0x64] sm:$0xf]
        %v1351 = vld [vmem:[%s8 + $0x68] sm:$0xf]
        %v1352 = vld [vmem:[%s9] sm:$0x1]
        %v1353 = vld [vmem:[%s10] sm:$0xf]
        %v1354 = vld [vmem:[%s10 + $0x4] sm:$0xf]
        %v1355 = vld [vmem:[%s10 + $0x8] sm:$0xf]
        %v1356 = vld [vmem:[%s10 + $0xc] sm:$0xf]
        %v1357 = vld [vmem:[%s10 + $0x10] sm:$0xf]
        %v1358 = vld [vmem:[%s10 + $0x14] sm:$0xf]
        %v1359 = vld [vmem:[%s10 + $0x18] sm:$0xf]
        %v1360 = vld [vmem:[%s10 + $0x1c] sm:$0xf]
        %v1361 = vld [vmem:[%s10 + $0x20] sm:$0xf]
        %v1362 = vld [vmem:[%s10 + $0x24] sm:$0xf]
        %v1363 = vld [vmem:[%s10 + $0x28] sm:$0xf]
        %v1364 = vld [vmem:[%s10 + $0x2c] sm:$0xf]
        %v1365 = vld [vmem:[%s10 + $0x30] sm:$0xf]
        %v1366 = vld [vmem:[%s10 + $0x34] sm:$0xf]
        %v1367 = vld [vmem:[%s10 + $0x38] sm:$0xf]
        %v1368 = vld [vmem:[%s10 + $0x3c] sm:$0xf]
        %v1369 = vld [vmem:[%s10 + $0x40] sm:$0xf]
        %v1370 = vld [vmem:[%s10 + $0x44] sm:$0xf]
        %v1371 = vld [vmem:[%s10 + $0x48] sm:$0xf]
        %v1372 = vld [vmem:[%s10 + $0x4c] sm:$0xf]
        %v1373 = vld [vmem:[%s10 + $0x50] sm:$0xf]
        %v1374 = vld [vmem:[%s10 + $0x54] sm:$0xf]
        %v1375 = vld [vmem:[%s10 + $0x58] sm:$0xf]
        %v1376 = vld [vmem:[%s10 + $0x5c] sm:$0xf]
        %v1377 = vld [vmem:[%s10 + $0x60] sm:$0xf]
        %v1378 = vld [vmem:[%s10 + $0x64] sm:$0xf]
        %v1379 = vld [vmem:[%s10 + $0x68] sm:$0xf]
        %v1380 = vld [vmem:[%s11] sm:$0x1]
        %1381 = vst.msk [vmem:[#allocation5] sm:$0xff] %vm1123, 0.0
        %1382 = vst.msk [vmem:[#allocation5 + $0x8] sm:$0xff] %vm1123, 0.0
        %1383 = vst.msk [vmem:[#allocation5 + $0x4] sm:$0xff] %vm1123, %v1324
        %v1384 = vld [vmem:[#allocation5] sm:$0xff]
        %v1385 = vld [vmem:[#allocation5 + $0x8] sm:$0xff]
        %v1388 = vrot.slane %v1384, 1
        %v1389 = vrot.slane %v1385, 1
        %v1390 = vsel %vm649, %v1388, %v1389
        %1391 = vrot.lane.b32.xlu0 %v1390, 24
        %v1392 = vpop.permute.xlu0 %1391
        %v1394 = vrot.slane %v1384, 2
        %v1395 = vrot.slane %v1385, 2
        %v1396 = vsel %vm661, %v1394, %v1395
        %1397 = vrot.lane.b32.xlu0 %v1396, 48
        %v1398 = vpop.permute.xlu0 %1397
        %v1400 = vrot.slane %v1384, 3
        %v1401 = vrot.slane %v1385, 3
        %v1402 = vsel %vm825, %v1400, %v1401
        %1403 = vrot.lane.b32.xlu0 %v1402, 72
        %v1404 = vpop.permute.xlu0 %1403
        %v1406 = vrot.slane %v1384, 4
        %v1407 = vrot.slane %v1385, 4
        %v1408 = vsel %vm837, %v1406, %v1407
        %1409 = vrot.lane.b32.xlu0 %v1408, 96
        %v1410 = vpop.permute.xlu0 %1409
        %v1412 = vrot.slane %v1384, 5
        %v1413 = vrot.slane %v1385, 5
        %v1414 = vsel %vm849, %v1412, %v1413
        %1415 = vrot.lane.b32.xlu0 %v1414, 120
        %v1416 = vpop.permute.xlu0 %1415
        %v1418 = vrot.slane %v1384, 6
        %v1419 = vrot.slane %v1385, 6
        %v1420 = vsel %vm861, %v1418, %v1419
        %1421 = vrot.lane.b32.xlu0 %v1420, 16
        %v1422 = vpop.permute.xlu0 %1421
        %v1424 = vrot.slane %v1384, 7
        %v1425 = vrot.slane %v1385, 7
        %v1426 = vsel %vm873, %v1424, %v1425
        %1427 = vrot.lane.b32.xlu0 %v1426, 40
        %v1428 = vpop.permute.xlu0 %1427
        %1430 = vrot.lane.b32.xlu0 %v1385, 64
        %v1431 = vpop.permute.xlu0 %1430
        %v1433 = vsel %vm1123, %v1384, %v1392
        %v1434 = vsel %vm697, %v1433, %v1398
        %v1435 = vsel %vm1178, %v1434, %v1404
        %v1436 = vsel %vm897, %v1435, %v1410
        %v1437 = vsel %vm1181, %v1436, %v1416
        %v1438 = vsel %vm636, %v1416, %v1422
        %v1439 = vsel %vm1184, %v1438, %v1428
        %v1440 = vsel %vm891, %v1439, %v1431
        %v1441 = vpack.c.bf16 %v1437, %v1437
        %v1442 = vpack.c.bf16 %v1440, %v1440
        %v1444 = vlaneseq
        %v1445 = vshrl.u32 %v1444, 7
        %v1446 = vsub.s32 0, %v1445
        %v1447 = vrot.slane %v1352, %v1446
        %v1476 = vunpack.c.l.b16 %v1325
        %v1477 = vunpack.c.l.b16 %v1326
        %v1478 = vunpack.c.l.b16 %v1327
        %v1479 = vunpack.c.l.b16 %v1328
        %v1480 = vunpack.c.l.b16 %v1329
        %v1481 = vunpack.c.l.b16 %v1330
        %v1482 = vunpack.c.l.b16 %v1331
        %v1483 = vunpack.c.l.b16 %v1332
        %v1484 = vunpack.c.l.b16 %v1333
        %v1485 = vunpack.c.l.b16 %v1334
        %v1486 = vunpack.c.l.b16 %v1335
        %v1487 = vunpack.c.l.b16 %v1336
        %v1488 = vunpack.c.l.b16 %v1337
        %v1489 = vunpack.c.l.b16 %v1338
        %v1490 = vunpack.c.l.b16 %v1339
        %v1491 = vunpack.c.l.b16 %v1340
        %v1492 = vunpack.c.l.b16 %v1341
        %v1493 = vunpack.c.l.b16 %v1342
        %v1494 = vunpack.c.l.b16 %v1343
        %v1495 = vunpack.c.l.b16 %v1344
        %v1496 = vunpack.c.l.b16 %v1345
        %v1497 = vunpack.c.l.b16 %v1346
        %v1498 = vunpack.c.l.b16 %v1347
        %v1499 = vunpack.c.l.b16 %v1348
        %v1500 = vunpack.c.l.b16 %v1349
        %v1501 = vunpack.c.l.b16 %v1350
        %v1502 = vunpack.c.l.b16 %v1351
        %v1503 = vpack.c.b16 %v1477, %v1476
        %v1504 = vpack.c.b16 %v1479, %v1478
        %v1505 = vpack.c.b16 %v1481, %v1480
        %v1506 = vpack.c.b16 %v1483, %v1482
        %v1507 = vpack.c.b16 %v1485, %v1484
        %v1508 = vpack.c.b16 %v1487, %v1486
        %v1509 = vpack.c.b16 %v1489, %v1488
        %v1510 = vpack.c.b16 %v1491, %v1490
        %v1511 = vpack.c.b16 %v1493, %v1492
        %v1512 = vpack.c.b16 %v1495, %v1494
        %v1513 = vpack.c.b16 %v1497, %v1496
        %v1514 = vpack.c.b16 %v1499, %v1498
        %v1515 = vpack.c.b16 %v1501, %v1500
        %v1516 = vpack.c.b16 %v1502, %v1502
        %v1531 = vsel %vm1276, %v1442, 0
        %v1534 = vsel %vm837, %v1516, 0
        %1536 = vmatprep.subr.bf16.mxu0 0
        %1537 = vmatpush1.bf16.msra.mxu0 %v1503
        %1538 = vmatprep.subr.bf16.mxu0 0
        %1539 = vmatpush1.bf16.msra.mxu0 %v1504
        %1540 = vmatprep.subr.bf16.mxu0 0
        %1541 = vmatpush1.bf16.msra.mxu0 %v1505
        %1542 = vmatprep.subr.bf16.mxu0 0
        %1543 = vmatpush1.bf16.msra.mxu0 %v1506
        %1544 = vmatprep.subr.bf16.mxu0 0
        %1545 = vmatpush1.bf16.msra.mxu0 %v1507
        %1546 = vmatprep.subr.bf16.mxu0 0
        %1547 = vmatpush1.bf16.msra.mxu0 %v1508
        %1548 = vmatprep.subr.bf16.mxu0 0
        %1549 = vmatpush1.bf16.msra.mxu0 %v1509
        %1550 = vmatprep.subr.bf16.mxu0 0
        %1551 = vmatpush1.bf16.msra.mxu0 %v1510
        %1552 = vmatprep.subr.bf16.mxu0 0
        %1553 = vmatpush1.bf16.msra.mxu0 %v1511
        %1554 = vmatprep.subr.bf16.mxu0 0
        %1555 = vmatpush1.bf16.msra.mxu0 %v1512
        %1556 = vmatprep.subr.bf16.mxu0 0
        %1557 = vmatpush1.bf16.msra.mxu0 %v1513
        %1558 = vmatprep.subr.bf16.mxu0 0
        %1559 = vmatpush1.bf16.msra.mxu0 %v1514
        %1560 = vmatprep.subr.bf16.mxu0 0
        %1561 = vmatpush1.bf16.msra.mxu0 %v1515
        %1562 = vmatprep.subr.bf16.mxu0 0
        %1563 = vmatpush1.bf16.msra.mxu0 %v1534
        %1564 = vmatprep.subr.bf16.mxu0 0
        %1565 = vmatpush1.bf16.msra.mxu0 0
        %1566 = vmatprep.subr.bf16.mxu0 0
        %1567 = vmatpush1.bf16.msra.mxu0 0
        %1568 = vmatprep.mubr.bf16.mxu0 %v1531
        %1569 = vmatmul.mubr.bf16.gmra.mrb[0].mxu0 %v1441
        %v1570 = vpop.f32.mrb[0].mxu0
        %v1571 = vadd.f32 %v1447, %v1570
        %v1572 = vpop.f32.mrb[0].mxu0
        %v1573 = vpop.f32.mrb[0].mxu0
        %v1574 = vpop.f32.mrb[0].mxu0
        %1575 = vdwg.mxu0
        %v1576 = vmax.f32 %v1571, 0.0
        %1577 = vst.msk [vmem:[#allocation6] sm:$0xff] %vm1123, 0.0
        %1578 = vst.msk [vmem:[#allocation6 + $0x8] sm:$0xff] %vm1123, 0.0
        %1579 = vst.msk [vmem:[#allocation6 + $0x4] sm:$0xff] %vm1123, %v1576
        %v1580 = vld [vmem:[#allocation6] sm:$0xff]
        %v1581 = vld [vmem:[#allocation6 + $0x8] sm:$0xff]
        %v1584 = vrot.slane %v1580, 1
        %v1585 = vrot.slane %v1581, 1
        %v1586 = vsel %vm649, %v1584, %v1585
        %1587 = vrot.lane.b32.xlu0 %v1586, 24
        %v1588 = vpop.permute.xlu0 %1587
        %v1590 = vrot.slane %v1580, 2
        %v1591 = vrot.slane %v1581, 2
        %v1592 = vsel %vm661, %v1590, %v1591
        %1593 = vrot.lane.b32.xlu0 %v1592, 48
        %v1594 = vpop.permute.xlu0 %1593
        %v1596 = vrot.slane %v1580, 3
        %v1597 = vrot.slane %v1581, 3
        %v1598 = vsel %vm825, %v1596, %v1597
        %1599 = vrot.lane.b32.xlu0 %v1598, 72
        %v1600 = vpop.permute.xlu0 %1599
        %v1602 = vrot.slane %v1580, 4
        %v1603 = vrot.slane %v1581, 4
        %v1604 = vsel %vm837, %v1602, %v1603
        %1605 = vrot.lane.b32.xlu0 %v1604, 96
        %v1606 = vpop.permute.xlu0 %1605
        %v1608 = vrot.slane %v1580, 5
        %v1609 = vrot.slane %v1581, 5
        %v1610 = vsel %vm849, %v1608, %v1609
        %1611 = vrot.lane.b32.xlu0 %v1610, 120
        %v1612 = vpop.permute.xlu0 %1611
        %v1614 = vrot.slane %v1580, 6
        %v1615 = vrot.slane %v1581, 6
        %v1616 = vsel %vm861, %v1614, %v1615
        %1617 = vrot.lane.b32.xlu0 %v1616, 16
        %v1618 = vpop.permute.xlu0 %1617
        %v1620 = vrot.slane %v1580, 7
        %v1621 = vrot.slane %v1581, 7
        %v1622 = vsel %vm873, %v1620, %v1621
        %1623 = vrot.lane.b32.xlu0 %v1622, 40
        %v1624 = vpop.permute.xlu0 %1623
        %1626 = vrot.lane.b32.xlu0 %v1581, 64
        %v1627 = vpop.permute.xlu0 %1626
        %v1629 = vsel %vm1123, %v1580, %v1588
        %v1630 = vsel %vm697, %v1629, %v1594
        %v1631 = vsel %vm1178, %v1630, %v1600
        %v1632 = vsel %vm897, %v1631, %v1606
        %v1633 = vsel %vm1181, %v1632, %v1612
        %v1634 = vsel %vm636, %v1612, %v1618
        %v1635 = vsel %vm1184, %v1634, %v1624
        %v1636 = vsel %vm891, %v1635, %v1627
        %v1637 = vpack.c.bf16 %v1633, %v1633
        %v1638 = vpack.c.bf16 %v1636, %v1636
        %v1640 = vlaneseq
        %v1641 = vshrl.u32 %v1640, 7
        %v1642 = vsub.s32 0, %v1641
        %v1643 = vrot.slane %v1380, %v1642
        %v1672 = vunpack.c.l.b16 %v1353
        %v1673 = vunpack.c.l.b16 %v1354
        %v1674 = vunpack.c.l.b16 %v1355
        %v1675 = vunpack.c.l.b16 %v1356
        %v1676 = vunpack.c.l.b16 %v1357
        %v1677 = vunpack.c.l.b16 %v1358
        %v1678 = vunpack.c.l.b16 %v1359
        %v1679 = vunpack.c.l.b16 %v1360
        %v1680 = vunpack.c.l.b16 %v1361
        %v1681 = vunpack.c.l.b16 %v1362
        %v1682 = vunpack.c.l.b16 %v1363
        %v1683 = vunpack.c.l.b16 %v1364
        %v1684 = vunpack.c.l.b16 %v1365
        %v1685 = vunpack.c.l.b16 %v1366
        %v1686 = vunpack.c.l.b16 %v1367
        %v1687 = vunpack.c.l.b16 %v1368
        %v1688 = vunpack.c.l.b16 %v1369
        %v1689 = vunpack.c.l.b16 %v1370
        %v1690 = vunpack.c.l.b16 %v1371
        %v1691 = vunpack.c.l.b16 %v1372
        %v1692 = vunpack.c.l.b16 %v1373
        %v1693 = vunpack.c.l.b16 %v1374
        %v1694 = vunpack.c.l.b16 %v1375
        %v1695 = vunpack.c.l.b16 %v1376
        %v1696 = vunpack.c.l.b16 %v1377
        %v1697 = vunpack.c.l.b16 %v1378
        %v1698 = vunpack.c.l.b16 %v1379
        %v1699 = vpack.c.b16 %v1673, %v1672
        %v1700 = vpack.c.b16 %v1675, %v1674
        %v1701 = vpack.c.b16 %v1677, %v1676
        %v1702 = vpack.c.b16 %v1679, %v1678
        %v1703 = vpack.c.b16 %v1681, %v1680
        %v1704 = vpack.c.b16 %v1683, %v1682
        %v1705 = vpack.c.b16 %v1685, %v1684
        %v1706 = vpack.c.b16 %v1687, %v1686
        %v1707 = vpack.c.b16 %v1689, %v1688
        %v1708 = vpack.c.b16 %v1691, %v1690
        %v1709 = vpack.c.b16 %v1693, %v1692
        %v1710 = vpack.c.b16 %v1695, %v1694
        %v1711 = vpack.c.b16 %v1697, %v1696
        %v1712 = vpack.c.b16 %v1698, %v1698
        %v1727 = vsel %vm1276, %v1638, 0
        %v1730 = vsel %vm837, %v1712, 0
        %1732 = vmatprep.subr.bf16.mxu0 0
        %1733 = vmatpush1.bf16.msra.mxu0 %v1699
        %1734 = vmatprep.subr.bf16.mxu0 0
        %1735 = vmatpush1.bf16.msra.mxu0 %v1700
        %1736 = vmatprep.subr.bf16.mxu0 0
        %1737 = vmatpush1.bf16.msra.mxu0 %v1701
        %1738 = vmatprep.subr.bf16.mxu0 0
        %1739 = vmatpush1.bf16.msra.mxu0 %v1702
        %1740 = vmatprep.subr.bf16.mxu0 0
        %1741 = vmatpush1.bf16.msra.mxu0 %v1703
        %1742 = vmatprep.subr.bf16.mxu0 0
        %1743 = vmatpush1.bf16.msra.mxu0 %v1704
        %1744 = vmatprep.subr.bf16.mxu0 0
        %1745 = vmatpush1.bf16.msra.mxu0 %v1705
        %1746 = vmatprep.subr.bf16.mxu0 0
        %1747 = vmatpush1.bf16.msra.mxu0 %v1706
        %1748 = vmatprep.subr.bf16.mxu0 0
        %1749 = vmatpush1.bf16.msra.mxu0 %v1707
        %1750 = vmatprep.subr.bf16.mxu0 0
        %1751 = vmatpush1.bf16.msra.mxu0 %v1708
        %1752 = vmatprep.subr.bf16.mxu0 0
        %1753 = vmatpush1.bf16.msra.mxu0 %v1709
        %1754 = vmatprep.subr.bf16.mxu0 0
        %1755 = vmatpush1.bf16.msra.mxu0 %v1710
        %1756 = vmatprep.subr.bf16.mxu0 0
        %1757 = vmatpush1.bf16.msra.mxu0 %v1711
        %1758 = vmatprep.subr.bf16.mxu0 0
        %1759 = vmatpush1.bf16.msra.mxu0 %v1730
        %1760 = vmatprep.subr.bf16.mxu0 0
        %1761 = vmatpush1.bf16.msra.mxu0 0
        %1762 = vmatprep.subr.bf16.mxu0 0
        %1763 = vmatpush1.bf16.msra.mxu0 0
        %1764 = vmatprep.mubr.bf16.mxu0 %v1727
        %1765 = vmatmul.mubr.bf16.gmra.mrb[0].mxu0 %v1637
        %v1766 = vpop.f32.mrb[0].mxu0
        %v1767 = vadd.f32 %v1643, %v1766
        %v1768 = vpop.f32.mrb[0].mxu0
        %v1769 = vpop.f32.mrb[0].mxu0
        %v1770 = vpop.f32.mrb[0].mxu0
        %1771 = vdwg.mxu0
        %1773 = vrot.lane.b32.xlu0 %v1437, 32
        %v1774 = vpop.permute.xlu0 %1773
        %v1776 = vadd.f32 %v1767, %v1774
        %v1777 = vmax.f32 %v1776, 0.0
        %v1778 = vld [vmem:[%s12] sm:$0xf]
        %v1779 = vld [vmem:[%s12 + $0x4] sm:$0xf]
        %v1780 = vld [vmem:[%s12 + $0x8] sm:$0xf]
        %v1781 = vld [vmem:[%s12 + $0xc] sm:$0xf]
        %v1782 = vld [vmem:[%s12 + $0x10] sm:$0xf]
        %v1783 = vld [vmem:[%s12 + $0x14] sm:$0xf]
        %v1784 = vld [vmem:[%s12 + $0x18] sm:$0xf]
        %v1785 = vld [vmem:[%s12 + $0x1c] sm:$0xf]
        %v1786 = vld [vmem:[%s12 + $0x20] sm:$0xf]
        %v1787 = vld [vmem:[%s12 + $0x24] sm:$0xf]
        %v1788 = vld [vmem:[%s12 + $0x28] sm:$0xf]
        %v1789 = vld [vmem:[%s12 + $0x2c] sm:$0xf]
        %v1790 = vld [vmem:[%s12 + $0x30] sm:$0xf]
        %v1791 = vld [vmem:[%s12 + $0x34] sm:$0xf]
        %v1792 = vld [vmem:[%s12 + $0x38] sm:$0xf]
        %v1793 = vld [vmem:[%s12 + $0x3c] sm:$0xf]
        %v1794 = vld [vmem:[%s12 + $0x40] sm:$0xf]
        %v1795 = vld [vmem:[%s12 + $0x44] sm:$0xf]
        %v1796 = vld [vmem:[%s12 + $0x48] sm:$0xf]
        %v1797 = vld [vmem:[%s12 + $0x4c] sm:$0xf]
        %v1798 = vld [vmem:[%s12 + $0x50] sm:$0xf]
        %v1799 = vld [vmem:[%s12 + $0x54] sm:$0xf]
        %v1800 = vld [vmem:[%s12 + $0x58] sm:$0xf]
        %v1801 = vld [vmem:[%s12 + $0x5c] sm:$0xf]
        %v1802 = vld [vmem:[%s12 + $0x60] sm:$0xf]
        %v1803 = vld [vmem:[%s12 + $0x64] sm:$0xf]
        %v1804 = vld [vmem:[%s12 + $0x68] sm:$0xf]
        %v1805 = vld [vmem:[%s13] sm:$0x1]
        %v1806 = vld [vmem:[%s14] sm:$0xf]
        %v1807 = vld [vmem:[%s14 + $0x4] sm:$0xf]
        %v1808 = vld [vmem:[%s14 + $0x8] sm:$0xf]
        %v1809 = vld [vmem:[%s14 + $0xc] sm:$0xf]
        %v1810 = vld [vmem:[%s14 + $0x10] sm:$0xf]
        %v1811 = vld [vmem:[%s14 + $0x14] sm:$0xf]
        %v1812 = vld [vmem:[%s14 + $0x18] sm:$0xf]
        %v1813 = vld [vmem:[%s14 + $0x1c] sm:$0xf]
        %v1814 = vld [vmem:[%s14 + $0x20] sm:$0xf]
        %v1815 = vld [vmem:[%s14 + $0x24] sm:$0xf]
        %v1816 = vld [vmem:[%s14 + $0x28] sm:$0xf]
        %v1817 = vld [vmem:[%s14 + $0x2c] sm:$0xf]
        %v1818 = vld [vmem:[%s14 + $0x30] sm:$0xf]
        %v1819 = vld [vmem:[%s14 + $0x34] sm:$0xf]
        %v1820 = vld [vmem:[%s14 + $0x38] sm:$0xf]
        %v1821 = vld [vmem:[%s14 + $0x3c] sm:$0xf]
        %v1822 = vld [vmem:[%s14 + $0x40] sm:$0xf]
        %v1823 = vld [vmem:[%s14 + $0x44] sm:$0xf]
        %v1824 = vld [vmem:[%s14 + $0x48] sm:$0xf]
        %v1825 = vld [vmem:[%s14 + $0x4c] sm:$0xf]
        %v1826 = vld [vmem:[%s14 + $0x50] sm:$0xf]
        %v1827 = vld [vmem:[%s14 + $0x54] sm:$0xf]
        %v1828 = vld [vmem:[%s14 + $0x58] sm:$0xf]
        %v1829 = vld [vmem:[%s14 + $0x5c] sm:$0xf]
        %v1830 = vld [vmem:[%s14 + $0x60] sm:$0xf]
        %v1831 = vld [vmem:[%s14 + $0x64] sm:$0xf]
        %v1832 = vld [vmem:[%s14 + $0x68] sm:$0xf]
        %v1833 = vld [vmem:[%s14 + $0x6c] sm:$0xf]
        %v1834 = vld [vmem:[%s14 + $0x70] sm:$0xf]
        %v1835 = vld [vmem:[%s14 + $0x74] sm:$0xf]
        %v1836 = vld [vmem:[%s14 + $0x78] sm:$0xf]
        %v1837 = vld [vmem:[%s14 + $0x7c] sm:$0xf]
        %v1838 = vld [vmem:[%s14 + $0x80] sm:$0xf]
        %v1839 = vld [vmem:[%s14 + $0x84] sm:$0xf]
        %v1840 = vld [vmem:[%s14 + $0x88] sm:$0xf]
        %v1841 = vld [vmem:[%s14 + $0x8c] sm:$0xf]
        %v1842 = vld [vmem:[%s15] sm:$0x1]
        %v1843 = vld [vmem:[%s16] sm:$0xf]
        %v1844 = vld [vmem:[%s16 + $0x4] sm:$0xf]
        %v1845 = vld [vmem:[%s16 + $0x8] sm:$0xf]
        %v1846 = vld [vmem:[%s17] sm:$0x1]
        %1847 = vst.msk [vmem:[#allocation7] sm:$0xff] %vm1123, 0.0
        %1848 = vst.msk [vmem:[#allocation7 + $0x8] sm:$0xff] %vm1123, 0.0
        %1849 = vst.msk [vmem:[#allocation7 + $0x4] sm:$0xff] %vm1123, %v1777
        %v1850 = vld [vmem:[#allocation7] sm:$0xff]
        %v1851 = vld [vmem:[#allocation7 + $0x8] sm:$0xff]
        %v1854 = vrot.slane %v1850, 1
        %v1855 = vrot.slane %v1851, 1
        %v1856 = vsel %vm649, %v1854, %v1855
        %1857 = vrot.lane.b32.xlu0 %v1856, 24
        %v1858 = vpop.permute.xlu0 %1857
        %v1860 = vrot.slane %v1850, 2
        %v1861 = vrot.slane %v1851, 2
        %v1862 = vsel %vm661, %v1860, %v1861
        %1863 = vrot.lane.b32.xlu0 %v1862, 48
        %v1864 = vpop.permute.xlu0 %1863
        %v1866 = vrot.slane %v1850, 3
        %v1867 = vrot.slane %v1851, 3
        %v1868 = vsel %vm825, %v1866, %v1867
        %1869 = vrot.lane.b32.xlu0 %v1868, 72
        %v1870 = vpop.permute.xlu0 %1869
        %v1872 = vrot.slane %v1850, 4
        %v1873 = vrot.slane %v1851, 4
        %v1874 = vsel %vm837, %v1872, %v1873
        %1875 = vrot.lane.b32.xlu0 %v1874, 96
        %v1876 = vpop.permute.xlu0 %1875
        %v1878 = vrot.slane %v1850, 5
        %v1879 = vrot.slane %v1851, 5
        %v1880 = vsel %vm849, %v1878, %v1879
        %1881 = vrot.lane.b32.xlu0 %v1880, 120
        %v1882 = vpop.permute.xlu0 %1881
        %v1884 = vrot.slane %v1850, 6
        %v1885 = vrot.slane %v1851, 6
        %v1886 = vsel %vm861, %v1884, %v1885
        %1887 = vrot.lane.b32.xlu0 %v1886, 16
        %v1888 = vpop.permute.xlu0 %1887
        %v1890 = vrot.slane %v1850, 7
        %v1891 = vrot.slane %v1851, 7
        %v1892 = vsel %vm873, %v1890, %v1891
        %1893 = vrot.lane.b32.xlu0 %v1892, 40
        %v1894 = vpop.permute.xlu0 %1893
        %1896 = vrot.lane.b32.xlu0 %v1851, 64
        %v1897 = vpop.permute.xlu0 %1896
        %v1899 = vsel %vm1123, %v1850, %v1858
        %v1900 = vsel %vm697, %v1899, %v1864
        %v1901 = vsel %vm1178, %v1900, %v1870
        %v1902 = vsel %vm897, %v1901, %v1876
        %v1903 = vsel %vm1181, %v1902, %v1882
        %v1904 = vsel %vm636, %v1882, %v1888
        %v1905 = vsel %vm1184, %v1904, %v1894
        %v1906 = vsel %vm891, %v1905, %v1897
        %v1907 = vpack.c.bf16 %v1903, %v1903
        %v1908 = vpack.c.bf16 %v1906, %v1906
        %vm1909 = vcmask 64512
        %v1910 = vsel %vm1909, %v911, 0
        %v1913 = vsel %vm837, %v1907, 0
        %v1916 = vsel %vm837, %v1908, 0
        %1918 = vmatprep.subr.bf16.mxu0 %v1916
        %1919 = vmatpush1.bf16.msra.mxu0 %v1913
        %1920 = vmatprep.subr.bf16.mxu0 0
        %1921 = vmatpush1.bf16.msra.mxu0 0
        %1922 = vmatprep.subr.bf16.mxu0 0
        %1923 = vmatpush1.bf16.msra.mxu0 0
        %1924 = vmatprep.subr.bf16.mxu0 0
        %1925 = vmatpush1.bf16.msra.mxu0 0
        %1926 = vmatprep.subr.bf16.mxu0 0
        %1927 = vmatpush1.bf16.msra.mxu0 0
        %1928 = vmatprep.subr.bf16.mxu0 0
        %1929 = vmatpush1.bf16.msra.mxu0 0
        %1930 = vmatprep.subr.bf16.mxu0 0
        %1931 = vmatpush1.bf16.msra.mxu0 0
        %1932 = vmatprep.subr.bf16.mxu0 0
        %1933 = vmatpush1.bf16.msra.mxu0 0
        %1934 = vmatprep.subr.bf16.mxu0 0
        %1935 = vmatpush1.bf16.msra.mxu0 0
        %1936 = vmatprep.subr.bf16.mxu0 0
        %1937 = vmatpush1.bf16.msra.mxu0 0
        %1938 = vmatprep.subr.bf16.mxu0 0
        %1939 = vmatpush1.bf16.msra.mxu0 0
        %1940 = vmatprep.subr.bf16.mxu0 0
        %1941 = vmatpush1.bf16.msra.mxu0 0
        %1942 = vmatprep.subr.bf16.mxu0 0
        %1943 = vmatpush1.bf16.msra.mxu0 0
        %1944 = vmatprep.subr.bf16.mxu0 0
        %1945 = vmatpush1.bf16.msra.mxu0 0
        %1946 = vmatprep.subr.bf16.mxu0 0
        %1947 = vmatpush1.bf16.msra.mxu0 0
        %1948 = vmatprep.subr.bf16.mxu0 0
        %1949 = vmatpush1.bf16.msra.mxu0 0
        %1950 = vmatprep.mubr.bf16.mxu0 0
        %1951 = vmatmul.mubr.bf16.gmra.mrb[0].mxu0 %v1910
        %v1952 = vpop.f32.mrb[0].mxu0
        %v1953 = vadd.f32 0.0, %v1952
        %v1954 = vpop.f32.mrb[0].mxu0
        %v1955 = vadd.f32 0.0, %v1954
        %v1956 = vpop.f32.mrb[0].mxu0
        %v1957 = vpop.f32.mrb[0].mxu0
        %1958 = vdwg.mxu0
        %v1959 = vpack.c.bf16 %v1953, %v1953
        %v1960 = vpack.c.bf16 %v1955, %v1955
        %v1962 = vlaneseq
        %v1963 = vshrl.u32 %v1962, 7
        %v1964 = vsub.s32 0, %v1963
        %v1965 = vrot.slane %v1805, %v1964
        %v1994 = vunpack.c.l.b16 %v1778
        %v1995 = vunpack.c.l.b16 %v1779
        %v1996 = vunpack.c.l.b16 %v1780
        %v1997 = vunpack.c.l.b16 %v1781
        %v1998 = vunpack.c.l.b16 %v1782
        %v1999 = vunpack.c.l.b16 %v1783
        %v2000 = vunpack.c.l.b16 %v1784
        %v2001 = vunpack.c.l.b16 %v1785
        %v2002 = vunpack.c.l.b16 %v1786
        %v2003 = vunpack.c.l.b16 %v1787
        %v2004 = vunpack.c.l.b16 %v1788
        %v2005 = vunpack.c.l.b16 %v1789
        %v2006 = vunpack.c.l.b16 %v1790
        %v2007 = vunpack.c.l.b16 %v1791
        %v2008 = vunpack.c.l.b16 %v1792
        %v2009 = vunpack.c.l.b16 %v1793
        %v2010 = vunpack.c.l.b16 %v1794
        %v2011 = vunpack.c.l.b16 %v1795
        %v2012 = vunpack.c.l.b16 %v1796
        %v2013 = vunpack.c.l.b16 %v1797
        %v2014 = vunpack.c.l.b16 %v1798
        %v2015 = vunpack.c.l.b16 %v1799
        %v2016 = vunpack.c.l.b16 %v1800
        %v2017 = vunpack.c.l.b16 %v1801
        %v2018 = vunpack.c.l.b16 %v1802
        %v2019 = vunpack.c.l.b16 %v1803
        %v2020 = vunpack.c.l.b16 %v1804
        %v2021 = vpack.c.b16 %v1995, %v1994
        %v2022 = vpack.c.b16 %v1997, %v1996
        %v2023 = vpack.c.b16 %v1999, %v1998
        %v2024 = vpack.c.b16 %v2001, %v2000
        %v2025 = vpack.c.b16 %v2003, %v2002
        %v2026 = vpack.c.b16 %v2005, %v2004
        %v2027 = vpack.c.b16 %v2007, %v2006
        %v2028 = vpack.c.b16 %v2009, %v2008
        %v2029 = vpack.c.b16 %v2011, %v2010
        %v2030 = vpack.c.b16 %v2013, %v2012
        %v2031 = vpack.c.b16 %v2015, %v2014
        %v2032 = vpack.c.b16 %v2017, %v2016
        %v2033 = vpack.c.b16 %v2019, %v2018
        %v2034 = vpack.c.b16 %v2020, %v2020
        %v2049 = vsel %vm1276, %v1960, 0
        %v2052 = vsel %vm837, %v2034, 0
        %2054 = vmatprep.subr.bf16.mxu0 0
        %2055 = vmatpush1.bf16.msra.mxu0 %v2021
        %2056 = vmatprep.subr.bf16.mxu0 0
        %2057 = vmatpush1.bf16.msra.mxu0 %v2022
        %2058 = vmatprep.subr.bf16.mxu0 0
        %2059 = vmatpush1.bf16.msra.mxu0 %v2023
        %2060 = vmatprep.subr.bf16.mxu0 0
        %2061 = vmatpush1.bf16.msra.mxu0 %v2024
        %2062 = vmatprep.subr.bf16.mxu0 0
        %2063 = vmatpush1.bf16.msra.mxu0 %v2025
        %2064 = vmatprep.subr.bf16.mxu0 0
        %2065 = vmatpush1.bf16.msra.mxu0 %v2026
        %2066 = vmatprep.subr.bf16.mxu0 0
        %2067 = vmatpush1.bf16.msra.mxu0 %v2027
        %2068 = vmatprep.subr.bf16.mxu0 0
        %2069 = vmatpush1.bf16.msra.mxu0 %v2028
        %2070 = vmatprep.subr.bf16.mxu0 0
        %2071 = vmatpush1.bf16.msra.mxu0 %v2029
        %2072 = vmatprep.subr.bf16.mxu0 0
        %2073 = vmatpush1.bf16.msra.mxu0 %v2030
        %2074 = vmatprep.subr.bf16.mxu0 0
        %2075 = vmatpush1.bf16.msra.mxu0 %v2031
        %2076 = vmatprep.subr.bf16.mxu0 0
        %2077 = vmatpush1.bf16.msra.mxu0 %v2032
        %2078 = vmatprep.subr.bf16.mxu0 0
        %2079 = vmatpush1.bf16.msra.mxu0 %v2033
        %2080 = vmatprep.subr.bf16.mxu0 0
        %2081 = vmatpush1.bf16.msra.mxu0 %v2052
        %2082 = vmatprep.subr.bf16.mxu0 0
        %2083 = vmatpush1.bf16.msra.mxu0 0
        %2084 = vmatprep.subr.bf16.mxu0 0
        %2085 = vmatpush1.bf16.msra.mxu0 0
        %2086 = vmatprep.mubr.bf16.mxu0 %v2049
        %2087 = vmatmul.mubr.bf16.gmra.mrb[0].mxu0 %v1959
        %v2088 = vpop.f32.mrb[0].mxu0
        %v2089 = vadd.f32 %v1965, %v2088
        %v2090 = vpop.f32.mrb[0].mxu0
        %v2091 = vpop.f32.mrb[0].mxu0
        %v2092 = vpop.f32.mrb[0].mxu0
        %2093 = vdwg.mxu0
        %v2094 = vmax.f32 %v2089, 0.0
        %v2096 = vlaneseq
        %v2097 = vshrl.u32 %v2096, 7
        %v2098 = vsub.s32 0, %v2097
        %v2099 = vrot.slane %v1846, %v2098
        %2102 = vrot.lane.b32.xlu0 %v1959, 32
        %v2103 = vpop.permute.xlu0 %2102
        %v2107 = vunpack.c.l.b16 %v1843
        %v2108 = vunpack.c.l.b16 %v1844
        %v2109 = vunpack.c.l.b16 %v1845
        %v2110 = vpack.c.b16 %v2108, %v2107
        %v2111 = vpack.c.b16 %v2109, %v2109
        %v2114 = vsel %vm1123, %v2103, 0
        %v2117 = vsel %vm837, %v2111, 0
        %2119 = vmatprep.subr.bf16.mxu0 0
        %2120 = vmatpush1.bf16.msra.mxu0 %v2110
        %2121 = vmatprep.subr.bf16.mxu0 0
        %2122 = vmatpush1.bf16.msra.mxu0 %v2117
        %2123 = vmatprep.subr.bf16.mxu0 0
        %2124 = vmatpush1.bf16.msra.mxu0 0
        %2125 = vmatprep.subr.bf16.mxu0 0
        %2126 = vmatpush1.bf16.msra.mxu0 0
        %2127 = vmatprep.subr.bf16.mxu0 0
        %2128 = vmatpush1.bf16.msra.mxu0 0
        %2129 = vmatprep.subr.bf16.mxu0 0
        %2130 = vmatpush1.bf16.msra.mxu0 0
        %2131 = vmatprep.subr.bf16.mxu0 0
        %2132 = vmatpush1.bf16.msra.mxu0 0
        %2133 = vmatprep.subr.bf16.mxu0 0
        %2134 = vmatpush1.bf16.msra.mxu0 0
        %2135 = vmatprep.subr.bf16.mxu0 0
        %2136 = vmatpush1.bf16.msra.mxu0 0
        %2137 = vmatprep.subr.bf16.mxu0 0
        %2138 = vmatpush1.bf16.msra.mxu0 0
        %2139 = vmatprep.subr.bf16.mxu0 0
        %2140 = vmatpush1.bf16.msra.mxu0 0
        %2141 = vmatprep.subr.bf16.mxu0 0
        %2142 = vmatpush1.bf16.msra.mxu0 0
        %2143 = vmatprep.subr.bf16.mxu0 0
        %2144 = vmatpush1.bf16.msra.mxu0 0
        %2145 = vmatprep.subr.bf16.mxu0 0
        %2146 = vmatpush1.bf16.msra.mxu0 0
        %2147 = vmatprep.subr.bf16.mxu0 0
        %2148 = vmatpush1.bf16.msra.mxu0 0
        %2149 = vmatprep.subr.bf16.mxu0 0
        %2150 = vmatpush1.bf16.msra.mxu0 0
        %2151 = vmatprep.mubr.bf16.mxu0 0
        %2152 = vmatmul.mubr.bf16.gmra.mrb[0].mxu0 %v2114
        %v2153 = vpop.f32.mrb[0].mxu0
        %v2154 = vadd.f32 %v2099, %v2153
        %v2155 = vpop.f32.mrb[0].mxu0
        %v2156 = vpop.f32.mrb[0].mxu0
        %v2157 = vpop.f32.mrb[0].mxu0
        %2158 = vdwg.mxu0
        %v2159 = vmax.f32 %v2154, 0.0
        %2160 = vst.msk [vmem:[#allocation8] sm:$0xff] %vm675, 0.0
        %vm2161 = vcmask 257024
        %2162 = vst.msk [vmem:[#allocation8 + $0x8] sm:$0xf] %vm2161, 0.0
        %2163 = vst.msk [vmem:[#allocation8 + $0x4] sm:$0xf] %vm2161, %v2094
        %v2164 = vld [vmem:[#allocation8] sm:$0xff]
        %v2165 = vld [vmem:[#allocation8 + $0x8] sm:$0xf]
        %v2167 = vrot.slane %v2164, 1
        %2168 = vrot.lane.b32.xlu0 %v2167, 32
        %v2169 = vpop.permute.xlu0 %2168
        %v2171 = vrot.slane %v2164, 2
        %2172 = vrot.lane.b32.xlu0 %v2171, 64
        %v2173 = vpop.permute.xlu0 %2172
        %v2175 = vrot.slane %v2164, 3
        %2176 = vrot.lane.b32.xlu0 %v2175, 96
        %v2177 = vpop.permute.xlu0 %2176
        %v2179 = vrot.slane %v2164, 4
        %v2182 = vrot.slane %v2164, 5
        %v2183 = vrot.slane %v2165, 5
        %v2184 = vsel %vm849, %v2182, %v2183
        %2185 = vrot.lane.b32.xlu0 %v2184, 32
        %v2186 = vpop.permute.xlu0 %2185
        %v2188 = vrot.slane %v2164, 6
        %v2189 = vrot.slane %v2165, 6
        %v2190 = vsel %vm861, %v2188, %v2189
        %2191 = vrot.lane.b32.xlu0 %v2190, 64
        %v2192 = vpop.permute.xlu0 %2191
        %v2194 = vrot.slane %v2164, 7
        %v2195 = vrot.slane %v2165, 7
        %v2196 = vsel %vm873, %v2194, %v2195
        %2197 = vrot.lane.b32.xlu0 %v2196, 96
        %v2198 = vpop.permute.xlu0 %2197
        %v2200 = vsel %vm675, %v2164, %v2169
        %v2201 = vsel %vm891, %v2200, %v2173
        %v2202 = vsel %vm897, %v2201, %v2177
        %v2203 = vsel %vm675, %v2179, %v2186
        %v2204 = vsel %vm891, %v2203, %v2192
        %v2205 = vsel %vm897, %v2204, %v2198
        %v2206 = vpack.c.bf16 %v2202, %v2202
        %v2207 = vpack.c.bf16 %v2205, %v2205
        %v2208 = vpack.c.bf16 %v2165, %v2165
        %v2210 = vlaneseq
        %v2211 = vshrl.u32 %v2210, 7
        %v2212 = vsub.s32 0, %v2211
        %v2213 = vrot.slane %v1842, %v2212
        %v2251 = vunpack.c.l.b16 %v1806
        %v2252 = vunpack.c.l.b16 %v1807
        %v2253 = vunpack.c.l.b16 %v1808
        %v2254 = vunpack.c.l.b16 %v1809
        %v2255 = vunpack.c.l.b16 %v1810
        %v2256 = vunpack.c.l.b16 %v1811
        %v2257 = vunpack.c.l.b16 %v1812
        %v2258 = vunpack.c.l.b16 %v1813
        %v2259 = vunpack.c.l.b16 %v1814
        %v2260 = vunpack.c.l.b16 %v1815
        %v2261 = vunpack.c.l.b16 %v1816
        %v2262 = vunpack.c.l.b16 %v1817
        %v2263 = vunpack.c.l.b16 %v1818
        %v2264 = vunpack.c.l.b16 %v1819
        %v2265 = vunpack.c.l.b16 %v1820
        %v2266 = vunpack.c.l.b16 %v1821
        %v2267 = vunpack.c.l.b16 %v1822
        %v2268 = vunpack.c.l.b16 %v1823
        %v2269 = vunpack.c.l.b16 %v1824
        %v2270 = vunpack.c.l.b16 %v1825
        %v2271 = vunpack.c.l.b16 %v1826
        %v2272 = vunpack.c.l.b16 %v1827
        %v2273 = vunpack.c.l.b16 %v1828
        %v2274 = vunpack.c.l.b16 %v1829
        %v2275 = vunpack.c.l.b16 %v1830
        %v2276 = vunpack.c.l.b16 %v1831
        %v2277 = vunpack.c.l.b16 %v1832
        %v2278 = vunpack.c.l.b16 %v1833
        %v2279 = vunpack.c.l.b16 %v1834
        %v2280 = vunpack.c.l.b16 %v1835
        %v2281 = vunpack.c.l.b16 %v1836
        %v2282 = vunpack.c.l.b16 %v1837
        %v2283 = vunpack.c.l.b16 %v1838
        %v2284 = vunpack.c.l.b16 %v1839
        %v2285 = vunpack.c.l.b16 %v1840
        %v2286 = vunpack.c.l.b16 %v1841
        %v2287 = vpack.c.b16 %v2252, %v2251
        %v2288 = vpack.c.b16 %v2254, %v2253
        %v2289 = vpack.c.b16 %v2256, %v2255
        %v2290 = vpack.c.b16 %v2258, %v2257
        %v2291 = vpack.c.b16 %v2260, %v2259
        %v2292 = vpack.c.b16 %v2262, %v2261
        %v2293 = vpack.c.b16 %v2264, %v2263
        %v2294 = vpack.c.b16 %v2266, %v2265
        %v2295 = vpack.c.b16 %v2268, %v2267
        %v2296 = vpack.c.b16 %v2270, %v2269
        %v2297 = vpack.c.b16 %v2272, %v2271
        %v2298 = vpack.c.b16 %v2274, %v2273
        %v2299 = vpack.c.b16 %v2276, %v2275
        %v2300 = vpack.c.b16 %v2278, %v2277
        %v2301 = vpack.c.b16 %v2280, %v2279
        %v2302 = vpack.c.b16 %v2282, %v2281
        %v2303 = vpack.c.b16 %v2284, %v2283
        %v2304 = vpack.c.b16 %v2286, %v2285
        %v2324 = vsel %vm675, %v2208, 0
        %2326 = vmatprep.subr.bf16.mxu0 0
        %2327 = vmatpush1.bf16.msra.mxu0 %v2287
        %2328 = vmatprep.subr.bf16.mxu0 0
        %2329 = vmatpush1.bf16.msra.mxu0 %v2288
        %2330 = vmatprep.subr.bf16.mxu0 0
        %2331 = vmatpush1.bf16.msra.mxu0 %v2289
        %2332 = vmatprep.subr.bf16.mxu0 0
        %2333 = vmatpush1.bf16.msra.mxu0 %v2290
        %2334 = vmatprep.subr.bf16.mxu0 0
        %2335 = vmatpush1.bf16.msra.mxu0 %v2291
        %2336 = vmatprep.subr.bf16.mxu0 0
        %2337 = vmatpush1.bf16.msra.mxu0 %v2292
        %2338 = vmatprep.subr.bf16.mxu0 0
        %2339 = vmatpush1.bf16.msra.mxu0 %v2293
        %2340 = vmatprep.subr.bf16.mxu0 0
        %2341 = vmatpush1.bf16.msra.mxu0 %v2294
        %2342 = vmatprep.subr.bf16.mxu0 0
        %2343 = vmatpush1.bf16.msra.mxu0 %v2295
        %2344 = vmatprep.subr.bf16.mxu0 0
        %2345 = vmatpush1.bf16.msra.mxu0 %v2296
        %2346 = vmatprep.subr.bf16.mxu0 0
        %2347 = vmatpush1.bf16.msra.mxu0 %v2297
        %2348 = vmatprep.subr.bf16.mxu0 0
        %2349 = vmatpush1.bf16.msra.mxu0 %v2298
        %2350 = vmatprep.subr.bf16.mxu0 0
        %2351 = vmatpush1.bf16.msra.mxu0 %v2299
        %2352 = vmatprep.subr.bf16.mxu0 0
        %2353 = vmatpush1.bf16.msra.mxu0 %v2300
        %2354 = vmatprep.subr.bf16.mxu0 0
        %2355 = vmatpush1.bf16.msra.mxu0 %v2301
        %2356 = vmatprep.subr.bf16.mxu0 0
        %2357 = vmatpush1.bf16.msra.mxu0 %v2302
        %2358 = vmatprep.mubr.bf16.mxu0 %v2207
        %2359 = vmatmul.mubr.bf16.gmra.mrb[0].mxu0 %v2206
        %v2360 = vpop.f32.mrb[0].mxu0
        %v2361 = vadd.f32 %v2213, %v2360
        %v2362 = vpop.f32.mrb[0].mxu0
        %v2363 = vpop.f32.mrb[0].mxu0
        %v2364 = vpop.f32.mrb[0].mxu0
        %2365 = vdwg.mxu0
        %2366 = vmatprep.subr.bf16.mxu0 0
        %2367 = vmatpush1.bf16.msra.mxu0 %v2303
        %2368 = vmatprep.subr.bf16.mxu0 0
        %2369 = vmatpush1.bf16.msra.mxu0 %v2304
        %2370 = vmatprep.subr.bf16.mxu0 0
        %2371 = vmatpush1.bf16.msra.mxu0 0
        %2372 = vmatprep.subr.bf16.mxu0 0
        %2373 = vmatpush1.bf16.msra.mxu0 0
        %2374 = vmatprep.subr.bf16.mxu0 0
        %2375 = vmatpush1.bf16.msra.mxu0 0
        %2376 = vmatprep.subr.bf16.mxu0 0
        %2377 = vmatpush1.bf16.msra.mxu0 0
        %2378 = vmatprep.subr.bf16.mxu0 0
        %2379 = vmatpush1.bf16.msra.mxu0 0
        %2380 = vmatprep.subr.bf16.mxu0 0
        %2381 = vmatpush1.bf16.msra.mxu0 0
        %2382 = vmatprep.subr.bf16.mxu0 0
        %2383 = vmatpush1.bf16.msra.mxu0 0
        %2384 = vmatprep.subr.bf16.mxu0 0
        %2385 = vmatpush1.bf16.msra.mxu0 0
        %2386 = vmatprep.subr.bf16.mxu0 0
        %2387 = vmatpush1.bf16.msra.mxu0 0
        %2388 = vmatprep.subr.bf16.mxu0 0
        %2389 = vmatpush1.bf16.msra.mxu0 0
        %2390 = vmatprep.subr.bf16.mxu0 0
        %2391 = vmatpush1.bf16.msra.mxu0 0
        %2392 = vmatprep.subr.bf16.mxu0 0
        %2393 = vmatpush1.bf16.msra.mxu0 0
        %2394 = vmatprep.subr.bf16.mxu0 0
        %2395 = vmatpush1.bf16.msra.mxu0 0
        %2396 = vmatprep.subr.bf16.mxu0 0
        %2397 = vmatpush1.bf16.msra.mxu0 0
        %2398 = vmatprep.mubr.bf16.mxu0 0
        %2399 = vmatmul.mubr.bf16.gmra.mrb[0].mxu0 %v2324
        %v2400 = vpop.f32.mrb[0].mxu0
        %v2401 = vadd.f32 %v2361, %v2400
        %v2402 = vpop.f32.mrb[0].mxu0
        %v2403 = vpop.f32.mrb[0].mxu0
        %v2404 = vpop.f32.mrb[0].mxu0
        %2405 = vdwg.mxu0
        %v2406 = vadd.f32 %v2401, %v2159
        %v2407 = vmax.f32 %v2406, 0.0
        %v2408 = vld [vmem:[%s18] sm:$0xf]
        %v2409 = vld [vmem:[%s18 + $0x4] sm:$0xf]
        %v2410 = vld [vmem:[%s18 + $0x8] sm:$0xf]
        %v2411 = vld [vmem:[%s18 + $0xc] sm:$0xf]
        %v2412 = vld [vmem:[%s19] sm:$0x1]
        %v2413 = vpack.c.bf16 %v2407, %v2407
        %v2418 = vunpack.c.l.b16 %v2408
        %v2419 = vunpack.c.l.b16 %v2409
        %v2420 = vunpack.c.l.b16 %v2410
        %v2421 = vunpack.c.l.b16 %v2411
        %v2422 = vpack.c.b16 %v2419, %v2418
        %v2423 = vpack.c.b16 %v2421, %v2420
        %v2427 = vsel %vm675, %v2413, 0
        %2429 = vmatprep.subr.bf16.mxu0 0
        %2430 = vmatpush1.bf16.msra.mxu0 %v2422
        %2431 = vmatprep.subr.bf16.mxu0 0
        %2432 = vmatpush1.bf16.msra.mxu0 %v2423
        %2433 = vmatprep.subr.bf16.mxu0 0
        %2434 = vmatpush1.bf16.msra.mxu0 0
        %2435 = vmatprep.subr.bf16.mxu0 0
        %2436 = vmatpush1.bf16.msra.mxu0 0
        %2437 = vmatprep.subr.bf16.mxu0 0
        %2438 = vmatpush1.bf16.msra.mxu0 0
        %2439 = vmatprep.subr.bf16.mxu0 0
        %2440 = vmatpush1.bf16.msra.mxu0 0
        %2441 = vmatprep.subr.bf16.mxu0 0
        %2442 = vmatpush1.bf16.msra.mxu0 0
        %2443 = vmatprep.subr.bf16.mxu0 0
        %2444 = vmatpush1.bf16.msra.mxu0 0
        %2445 = vmatprep.subr.bf16.mxu0 0
        %2446 = vmatpush1.bf16.msra.mxu0 0
        %2447 = vmatprep.subr.bf16.mxu0 0
        %2448 = vmatpush1.bf16.msra.mxu0 0
        %2449 = vmatprep.subr.bf16.mxu0 0
        %2450 = vmatpush1.bf16.msra.mxu0 0
        %2451 = vmatprep.subr.bf16.mxu0 0
        %2452 = vmatpush1.bf16.msra.mxu0 0
        %2453 = vmatprep.subr.bf16.mxu0 0
        %2454 = vmatpush1.bf16.msra.mxu0 0
        %2455 = vmatprep.subr.bf16.mxu0 0
        %2456 = vmatpush1.bf16.msra.mxu0 0
        %2457 = vmatprep.subr.bf16.mxu0 0
        %2458 = vmatpush1.bf16.msra.mxu0 0
        %2459 = vmatprep.subr.bf16.mxu0 0
        %2460 = vmatpush1.bf16.msra.mxu0 0
        %2461 = vmatprep.mubr.bf16.mxu0 0
        %2462 = vmatmul.mubr.bf16.gmra.mrb[0].mxu0 %v2427
        %v2463 = vpop.f32.mrb[0].mxu0
        %v2464 = vadd.f32 0.0, %v2463
        %v2465 = vpop.f32.mrb[0].mxu0
        %v2466 = vpop.f32.mrb[0].mxu0
        %v2467 = vpop.f32.mrb[0].mxu0
        %2468 = vdwg.mxu0
        %vm2469 = vcmask 76800
        %v2470 = vsel %vm2469, %v2464, 0.0
        %v2471 = vrot.slane %v2470, 4
        %v2472 = vadd.f32 %v2470, %v2471
        %v2473 = vrot.slane %v2472, 2
        %v2474 = vadd.f32 %v2472, %v2473
        %v2475 = vrot.slane %v2474, 1
        %v2476 = vadd.f32 %v2474, %v2475
        %v2477 = vadd.f32 %v2476, %v2412
        %vm2478 = vcmask 73728
        %2479 = vst.msk [vmem:[%s621] sm:$0x1] %vm2478, %v2477
        %s2480 = sand.u32 %s467, 1
        %s2481 = scalar_lea.sflag [#allocation10], %s2480
        %s2482 = sand.u32 %s467, 1
        %s2483 = scalar_lea.vmem [#allocation9], %s2482
        // Predicated region
        $region101: #{tpu_custom_call.1} parent=99 // pred_check
          %p2484 = pneg %p477
        $region102: #{tpu_custom_call.1} parent=99 // pred_check_branch
          %2486 = sbr.rel (%p2484) target = $region104
        $region103: #{tpu_custom_call.1} parent=99 // pred_region
          %s2488 = ssub.s32 16, 16
          %2489 = vsyncadd %s2481, %s2488
          %s2490 = smul.addr %s34, 16
          %s2491 = scalar_lea.hbm %s20, %s2490
          %s2493 = sshll.u32 %s2483, 4
          %s2494 = int_to_ptr.vmem [resolvable:$true] %s2493
          %2496 = dma.vmem_to_hbm [thread:$0]  %s2494, 16, %s2491, %s2481
        $region104: #{tpu_custom_call.1} parent=99 // pred_fallthru
          _
      $region100: #{tpu_custom_call.1} parent=5 // pred_fallthru
        _
      %p2497 = scmp.le.s32.totalorder 2, %s29
      // Predicated region
      $region105: #{tpu_custom_call.1} parent=5 // pred_check
        %p2498 = pneg %p2497
      $region106: #{tpu_custom_call.1} parent=5 // pred_check_branch
        %2500 = sbr.rel (%p2498) target = $region108
      $region107: #{tpu_custom_call.1} parent=5 // pred_region
        %s2501 = ssub.s32 %s29, 2
        // Predicated region
        $region109: #{tpu_custom_call.1} parent=107 // pred_check
          %p2502 = pneg %p483
        $region110: #{tpu_custom_call.1} parent=107 // pred_check_branch
          %2504 = sbr.rel (%p2502) target = $region112
        $region111: #{tpu_custom_call.1} parent=107 // pred_region
          %s2505 = sand.u32 %s468, 1
          %s2506 = scalar_lea.sflag [#allocation10], %s2505
          %s2507 = sand.u32 %s468, 1
          %s2508 = scalar_lea.vmem [#allocation9], %s2507
          %2509 = dma.done %s2506, 16
        $region112: #{tpu_custom_call.1} parent=107 // pred_fallthru
          _
      $region108: #{tpu_custom_call.1} parent=5 // pred_fallthru
        _
    $region6: #{tpu_custom_call.1} parent=1 // loop_footer
      %s33 = sadd.s32 1, %s29
    $region7: #{tpu_custom_call.1} parent=1 // loop_footer_branch
      %28 = sbr.rel target = $region3
    $region8: #{tpu_custom_call.1} parent=1 // loop_exit
      _
    %2510 = vsyncpa [#allocation10], 1
    %s2511 = scalar_lea.sflag [#allocation10], 1
    %2512 = vsyncpa %s2511, 1

</llo_original>
